<compile_context>
chip_gen: v7x
topology: tpu7x:2x2x1
jax: 0.10.0
libtpu: 0.0.40
codegen_flags: <defaults>
</compile_context>

<pallas_src>
import functools

import jax
import jax.numpy as jnp
from jax.experimental import pallas as pl
from jax.experimental.pallas import tpu as pltpu


def _round_up(n, m):
    return ((n + m - 1) // m) * m


def _mlp_kernel(x_ref, w1_ref, b1_ref, w2_ref, b2_ref, w3_ref, b3_ref, o_ref,
                *, fuse_log_softmax):
    """One batch tile of the MLP.

    x_ref : [tb, 784] f32 (cast to bf16 in-kernel, right before the MXU)
    w*_ref: bf16 [in, out]       b*_ref: f32 [1, out]
    o_ref : [tb, 10]  f32 logits (or log-probs when fuse_log_softmax).
    """
    x = x_ref[...].astype(jnp.bfloat16)            # in-kernel cast: no extra HBM pass
    h1 = jnp.dot(x, w1_ref[...], preferred_element_type=jnp.float32) + b1_ref[...]
    h1 = jnp.maximum(h1, 0.0)                      # ReLU (f32)
    h2 = jnp.dot(h1.astype(jnp.bfloat16), w2_ref[...],
                 preferred_element_type=jnp.float32) + b2_ref[...]
    h2 = jnp.maximum(h2, 0.0)                      # ReLU (f32)
    z = jnp.dot(h2.astype(jnp.bfloat16), w3_ref[...],
                preferred_element_type=jnp.float32) + b3_ref[...]

    if fuse_log_softmax:
        # Only used when the whole batch is resident in this single block
        # (tb == B), so the dim=0 (batch-axis) log-softmax is exact in-register.
        m = jnp.max(z, axis=0, keepdims=True)
        s = z - m
        lse = jnp.log(jnp.sum(jnp.exp(s), axis=0, keepdims=True))
        z = s - lse

    o_ref[...] = z.astype(o_ref.dtype)


@jax.jit
def basic_linear_model_forward(x, params):
    """x: [B, C, H, W] with C*H*W == 784. Returns log-probs [B, 10] (LogSoftmax dim=0)."""
    b = x.shape[0]
    x2d = x.reshape(b, -1).astype(jnp.float32)     # flatten(start_dim=1); bf16 cast happens in-kernel

    w1, b1, w2, b2, w3, b3 = params                # weights bf16, biases f32 (pre-cast at init)

    # Batch tiling:
    #  * B <= 1024: one full-extent tile (tb == B) -> big tile amortizes the
    #    per-step overhead / weight DMA and lets the dim-0 log-softmax fuse
    #    into the same kernel (no second pass over the logits).
    #  * B  > 1024: up to 1024-row tiles, capped so the "parallel" grid has
    #    >= 4 steps, which keeps both v7x TensorCores busy (v5e/v6e have one
    #    TC and simply see large tiles).
    if b <= 1024:
        tb = b
        fuse = True
    else:
        tb = min(1024, _round_up(pl.cdiv(b, 4), 256))
        fuse = False

    grid = (pl.cdiv(b, tb),)

    def replicated(shape):
        # Constant block index: Pallas keeps the block VMEM-resident across
        # grid steps (no re-DMA), so weights are loaded once per call.
        return pl.BlockSpec(shape, lambda i: tuple(0 for _ in shape))

    kernel = functools.partial(_mlp_kernel, fuse_log_softmax=fuse)

    out = pl.pallas_call(
        kernel,
        out_shape=jax.ShapeDtypeStruct((b, 10), jnp.float32),
        grid=grid,
        in_specs=[
            pl.BlockSpec((tb, 784), lambda i: (i, 0)),
            replicated(w1.shape), replicated(b1.shape),
            replicated(w2.shape), replicated(b2.shape),
            replicated(w3.shape), replicated(b3.shape),
        ],
        out_specs=pl.BlockSpec((tb, 10), lambda i: (i, 0)),
        compiler_params=pltpu.CompilerParams(
            dimension_semantics=("parallel",)),
    )(x2d, w1, b1, w2, b2, w3, b3)

    if not fuse:
        # Multi-tile batch: the dim=0 log-softmax couples all rows across
        # tiles but touches only B*40 bytes -- a second Pallas call would be
        # pure launch overhead, so let XLA fuse it (per perf review).
        out = jax.nn.log_softmax(out, axis=0)
    return out


def nll_loss(log_probs, labels):
    """Plain-JAX glue equivalent of nn.NLLLoss() (mean reduction); only used for
    the training-mode (x, loss) return of the reference module."""
    picked = jnp.take_along_axis(log_probs, labels[:, None], axis=1)[:, 0]
    return -jnp.mean(picked)


def init_params(key):
    """nn.Linear-style U(-1/sqrt(fan_in), 1/sqrt(fan_in)) init.
    Weights stored [in, out] (transposed vs. PyTorch's [out, in]) and pre-cast
    to bf16 once here (MXU-native); biases stay f32."""
    dims = [(784, 320), (320, 100), (100, 10)]
    params = []
    for fan_in, fan_out in dims:
        key, kw, kb = jax.random.split(key, 3)
        bound = 1.0 / jnp.sqrt(jnp.float32(fan_in))
        w = jax.random.uniform(kw, (fan_in, fan_out), jnp.float32, -bound, bound)
        bias = jax.random.uniform(kb, (1, fan_out), jnp.float32, -bound, bound)
        params += [w.astype(jnp.bfloat16), bias.astype(jnp.float32)]
    return tuple(params)


def _reference_forward(x, params):
    """Pure-JAX f32 reference for a relaxed-tolerance bf16 validation."""
    w1, b1, w2, b2, w3, b3 = params
    w1, w2, w3 = (w.astype(jnp.float32) for w in (w1, w2, w3))
    h = x.reshape(x.shape[0], -1)
    h = jnp.maximum(h @ w1 + b1, 0.0)
    h = jnp.maximum(h @ w2 + b2, 0.0)
    z = h @ w3 + b3
    return jax.nn.log_softmax(z, axis=0)


if __name__ == "__main__":
    key = jax.random.PRNGKey(0)
    key, kx, kl = jax.random.split(key, 3)

    params = init_params(key)

    # Input consistent with flatten(start_dim=1) -> 784 features: [B, 1, 28, 28]
    B = 8
    x = jax.random.normal(kx, (B, 1, 28, 28), jnp.float32)
    labels = jax.random.randint(kl, (B,), 0, 10)

    log_probs = basic_linear_model_forward(x, params)
    jax.block_until_ready(log_probs)
    assert log_probs.shape == (B, 10)

    # Relaxed-tolerance check vs. f32 reference (bf16 operand rounding only;
    # accumulation stayed f32 inside the kernel).
    ref = _reference_forward(x, params)
    max_err = float(jnp.max(jnp.abs(log_probs - ref)))
    assert max_err < 5e-2, f"mismatch vs f32 reference: {max_err}"

    # Optional training-mode output (x, loss); loss computed in plain-JAX glue.
    loss = nll_loss(log_probs, labels)
    jax.block_until_ready(loss)

    print("KERNEL_OK")
</pallas_src>

<mosaic_0001>
module attributes {stable_mosaic.version = 11 : i64} {
  func.func @_mlp_kernel(%arg0: i32, %arg1: memref<8x784xf32, #tpu.memory_space<vmem>>, %arg2: memref<784x320xbf16, #tpu.memory_space<vmem>>, %arg3: memref<1x320xf32, #tpu.memory_space<vmem>>, %arg4: memref<320x100xbf16, #tpu.memory_space<vmem>>, %arg5: memref<1x100xf32, #tpu.memory_space<vmem>>, %arg6: memref<100x10xbf16, #tpu.memory_space<vmem>>, %arg7: memref<1x10xf32, #tpu.memory_space<vmem>>, %arg8: memref<8x10xf32, #tpu.memory_space<vmem>>) attributes {dimension_semantics = [#tpu.dimension_semantics<parallel>], iteration_bounds = array<i64: 1>, scalar_prefetch = 0 : i64, scratch_operands = 0 : i64, tpu.core_type = #tpu.core_type<tc>, window_params = [{transform_indices = @transform_0, window_bounds = array<i64: 8, 784>}, {pipeline_mode = #tpu.pipeline_mode<synchronous>, transform_indices = @transform_1, window_bounds = array<i64: 784, 320>}, {pipeline_mode = #tpu.pipeline_mode<synchronous>, transform_indices = @transform_2, window_bounds = array<i64: 1, 320>}, {pipeline_mode = #tpu.pipeline_mode<synchronous>, transform_indices = @transform_3, window_bounds = array<i64: 320, 100>}, {pipeline_mode = #tpu.pipeline_mode<synchronous>, transform_indices = @transform_4, window_bounds = array<i64: 1, 100>}, {pipeline_mode = #tpu.pipeline_mode<synchronous>, transform_indices = @transform_5, window_bounds = array<i64: 100, 10>}, {pipeline_mode = #tpu.pipeline_mode<synchronous>, transform_indices = @transform_6, window_bounds = array<i64: 1, 10>}, {transform_indices = @transform_7, window_bounds = array<i64: 8, 10>}]} {
    %c0 = arith.constant 0 : index
    %c0_0 = arith.constant 0 : index
    %0 = vector.load %arg1[%c0, %c0_0] : memref<8x784xf32, #tpu.memory_space<vmem>>, vector<8x784xf32>
    %1 = arith.truncf %0 : vector<8x784xf32> to vector<8x784xbf16>
    %c0_1 = arith.constant 0 : index
    %c0_2 = arith.constant 0 : index
    %2 = vector.load %arg2[%c0_1, %c0_2] : memref<784x320xbf16, #tpu.memory_space<vmem>>, vector<784x320xbf16>
    %cst = arith.constant dense<0.000000e+00> : vector<8x320xf32>
    %3 = tpu.matmul %1, %2, %cst {dimension_numbers = #tpu.dot_dimension_numbers<[1], [0], [0], [1], [0, 0, 1, 1], [], []>} : vector<8x784xbf16>, vector<784x320xbf16>, vector<8x320xf32> -> vector<8x320xf32>
    %c0_3 = arith.constant 0 : index
    %c0_4 = arith.constant 0 : index
    %4 = vector.load %arg3[%c0_3, %c0_4] : memref<1x320xf32, #tpu.memory_space<vmem>>, vector<1x320xf32>
    %5 = vector.broadcast %4 : vector<1x320xf32> to vector<8x320xf32>
    %6 = arith.addf %3, %5 : vector<8x320xf32>
    %cst_5 = arith.constant 0.000000e+00 : f32
    %7 = vector.broadcast %cst_5 : f32 to vector<8x320xf32>
    %8 = arith.maximumf %6, %7 : vector<8x320xf32>
    %9 = arith.truncf %8 : vector<8x320xf32> to vector<8x320xbf16>
    %c0_6 = arith.constant 0 : index
    %c0_7 = arith.constant 0 : index
    %10 = vector.load %arg4[%c0_6, %c0_7] : memref<320x100xbf16, #tpu.memory_space<vmem>>, vector<320x100xbf16>
    %cst_8 = arith.constant dense<0.000000e+00> : vector<8x100xf32>
    %11 = tpu.matmul %9, %10, %cst_8 {dimension_numbers = #tpu.dot_dimension_numbers<[1], [0], [0], [1], [0, 0, 1, 1], [], []>} : vector<8x320xbf16>, vector<320x100xbf16>, vector<8x100xf32> -> vector<8x100xf32>
    %c0_9 = arith.constant 0 : index
    %c0_10 = arith.constant 0 : index
    %12 = vector.load %arg5[%c0_9, %c0_10] : memref<1x100xf32, #tpu.memory_space<vmem>>, vector<1x100xf32>
    %13 = vector.broadcast %12 : vector<1x100xf32> to vector<8x100xf32>
    %14 = arith.addf %11, %13 : vector<8x100xf32>
    %cst_11 = arith.constant 0.000000e+00 : f32
    %15 = vector.broadcast %cst_11 : f32 to vector<8x100xf32>
    %16 = arith.maximumf %14, %15 : vector<8x100xf32>
    %17 = arith.truncf %16 : vector<8x100xf32> to vector<8x100xbf16>
    %c0_12 = arith.constant 0 : index
    %c0_13 = arith.constant 0 : index
    %18 = vector.load %arg6[%c0_12, %c0_13] : memref<100x10xbf16, #tpu.memory_space<vmem>>, vector<100x10xbf16>
    %cst_14 = arith.constant dense<0.000000e+00> : vector<8x10xf32>
    %19 = tpu.matmul %17, %18, %cst_14 {dimension_numbers = #tpu.dot_dimension_numbers<[1], [0], [0], [1], [0, 0, 1, 1], [], []>} : vector<8x100xbf16>, vector<100x10xbf16>, vector<8x10xf32> -> vector<8x10xf32>
    %c0_15 = arith.constant 0 : index
    %c0_16 = arith.constant 0 : index
    %20 = vector.load %arg7[%c0_15, %c0_16] : memref<1x10xf32, #tpu.memory_space<vmem>>, vector<1x10xf32>
    %21 = vector.broadcast %20 : vector<1x10xf32> to vector<8x10xf32>
    %22 = arith.addf %19, %21 : vector<8x10xf32>
    %cst_17 = arith.constant dense<0xFF800000> : vector<10xf32>
    %23 = vector.multi_reduction <maximumf>, %22, %cst_17 [0] : vector<8x10xf32> to vector<10xf32>
    %24 = vector.shape_cast %23 : vector<10xf32> to vector<1x10xf32>
    %25 = vector.broadcast %24 : vector<1x10xf32> to vector<8x10xf32>
    %26 = arith.subf %22, %25 : vector<8x10xf32>
    %27 = math.exp %26 : vector<8x10xf32>
    %cst_18 = arith.constant dense<0.000000e+00> : vector<10xf32>
    %28 = vector.multi_reduction <add>, %27, %cst_18 [0] : vector<8x10xf32> to vector<10xf32>
    %29 = vector.shape_cast %28 : vector<10xf32> to vector<1x10xf32>
    %30 = math.log %29 : vector<1x10xf32>
    %31 = vector.broadcast %30 : vector<1x10xf32> to vector<8x10xf32>
    %32 = arith.subf %26, %31 : vector<8x10xf32>
    %c0_19 = arith.constant 0 : index
    %c0_20 = arith.constant 0 : index
    %33 = vector.load %arg8[%c0_19, %c0_20] : memref<8x10xf32, #tpu.memory_space<vmem>>, vector<8x10xf32>
    tpu.vector_store %arg8[%c0_19, %c0_20], %32 {strides = array<i32>} : memref<8x10xf32, #tpu.memory_space<vmem>>, vector<8x10xf32>,
    return
  }
  func.func @transform_0(%arg0: i32) -> (i32, i32) {
    %c0_i32 = arith.constant 0 : i32
    %c0_i32_0 = arith.constant 0 : i32
    return %arg0, %c0_i32 : i32, i32
  }
  func.func @transform_1(%arg0: i32) -> (i32, i32) {
    %c0_i32 = arith.constant 0 : i32
    %c0_i32_0 = arith.constant 0 : i32
    %c0_i32_1 = arith.constant 0 : i32
    return %c0_i32, %c0_i32_0 : i32, i32
  }
  func.func @transform_2(%arg0: i32) -> (i32, i32) {
    %c0_i32 = arith.constant 0 : i32
    %c0_i32_0 = arith.constant 0 : i32
    %c0_i32_1 = arith.constant 0 : i32
    return %c0_i32, %c0_i32_0 : i32, i32
  }
  func.func @transform_3(%arg0: i32) -> (i32, i32) {
    %c0_i32 = arith.constant 0 : i32
    %c0_i32_0 = arith.constant 0 : i32
    %c0_i32_1 = arith.constant 0 : i32
    return %c0_i32, %c0_i32_0 : i32, i32
  }
  func.func @transform_4(%arg0: i32) -> (i32, i32) {
    %c0_i32 = arith.constant 0 : i32
    %c0_i32_0 = arith.constant 0 : i32
    %c0_i32_1 = arith.constant 0 : i32
    return %c0_i32, %c0_i32_0 : i32, i32
  }
  func.func @transform_5(%arg0: i32) -> (i32, i32) {
    %c0_i32 = arith.constant 0 : i32
    %c0_i32_0 = arith.constant 0 : i32
    %c0_i32_1 = arith.constant 0 : i32
    return %c0_i32, %c0_i32_0 : i32, i32
  }
  func.func @transform_6(%arg0: i32) -> (i32, i32) {
    %c0_i32 = arith.constant 0 : i32
    %c0_i32_0 = arith.constant 0 : i32
    %c0_i32_1 = arith.constant 0 : i32
    return %c0_i32, %c0_i32_0 : i32, i32
  }
  func.func @transform_7(%arg0: i32) -> (i32, i32) {
    %c0_i32 = arith.constant 0 : i32
    %c0_i32_0 = arith.constant 0 : i32
    return %arg0, %c0_i32 : i32, i32
  }
}

</mosaic_0001>

<llo_original>
// kernel: basic_linear_model_forward.1
$region0: #{basic_linear_model_forward.1}
  #allocation0 [shape = 'u32[]', space=smem, size = 0x4, offset = 0x4, fixed_abs, tag = 'smem constant byte address 0x4 - core index']
  #allocation1 [shape = 'u32[144,128]{1,0:T(1,128)}', space=vmem, size = 0x12000, scoped, tag = 'internal scratch']
  %s0 = inlined_call_operand.vmem [shape: f32[8,784], index: 0, kind: input, shape index: {}]
  %s1 = inlined_call_operand.vmem [shape: bf16[784,320], index: 1, kind: input, shape index: {}]
  %s2 = inlined_call_operand.vmem [shape: f32[1,320], index: 2, kind: input, shape index: {}]
  %s3 = inlined_call_operand.vmem [shape: bf16[320,100], index: 3, kind: input, shape index: {}]
  %s4 = inlined_call_operand.vmem [shape: f32[1,100], index: 4, kind: input, shape index: {}]
  %s5 = inlined_call_operand.vmem [shape: bf16[100,10], index: 5, kind: input, shape index: {}]
  %s6 = inlined_call_operand.vmem [shape: f32[1,10], index: 6, kind: input, shape index: {}]
  %s7 = inlined_call_operand.hbm [shape: f32[8,10], index: 7, kind: output, shape index: {}]
  %s8 = sld [smem:[#allocation0]]
  $region38: #{basic_linear_model_forward.1} parent=0
    _
  %s10 = ssub.s32 1, %s8
  %s11 = scalar_select 0, %s10, %s8
  $region1: #{basic_linear_model_forward.1} parent=0
    #allocation2 [shape = 'u8[4096]{0}', space=vmem, size = 0x1000, scoped, tag = 'output window, operand 0, single buffered']
    #allocation3 [shape = 's32[1]{0}', space=sflag, size = 0x4, scoped, tag = 'scoped memory for basic_linear_model_forward.1']
    %12 = vsyncpa [#allocation3], 0
    // Predicated region
    $region2: #{basic_linear_model_forward.1} parent=1 // pred_check
      _
    $region3: #{basic_linear_model_forward.1} parent=1 // pred_check_branch
      %14 = sbr.rel (0) target = $region5
    $region4: #{basic_linear_model_forward.1} parent=1 // pred_region
      _
    $region5: #{basic_linear_model_forward.1} parent=1 // pred_fallthru
      _
    // Predicated region
    $region6: #{basic_linear_model_forward.1} parent=1 // pred_check
      _
    $region7: #{basic_linear_model_forward.1} parent=1 // pred_check_branch
      %16 = sbr.rel (0) target = $region9
    $region8: #{basic_linear_model_forward.1} parent=1 // pred_region
      _
    $region9: #{basic_linear_model_forward.1} parent=1 // pred_fallthru
      _
    // Predicated region
    $region10: #{basic_linear_model_forward.1} parent=1 // pred_check
      _
    $region11: #{basic_linear_model_forward.1} parent=1 // pred_check_branch
      %18 = sbr.rel (0) target = $region13
    $region12: #{basic_linear_model_forward.1} parent=1 // pred_region
      _
    $region13: #{basic_linear_model_forward.1} parent=1 // pred_fallthru
      _
    // Predicated region
    $region14: #{basic_linear_model_forward.1} parent=1 // pred_check
      _
    $region15: #{basic_linear_model_forward.1} parent=1 // pred_check_branch
      %20 = sbr.rel (0) target = $region17
    $region16: #{basic_linear_model_forward.1} parent=1 // pred_region
      _
    $region17: #{basic_linear_model_forward.1} parent=1 // pred_fallthru
      _
    // Predicated region
    $region18: #{basic_linear_model_forward.1} parent=1 // pred_check
      _
    $region19: #{basic_linear_model_forward.1} parent=1 // pred_check_branch
      %22 = sbr.rel (0) target = $region21
    $region20: #{basic_linear_model_forward.1} parent=1 // pred_region
      _
    $region21: #{basic_linear_model_forward.1} parent=1 // pred_fallthru
      _
    // Predicated region
    $region22: #{basic_linear_model_forward.1} parent=1 // pred_check
      _
    $region23: #{basic_linear_model_forward.1} parent=1 // pred_check_branch
      %24 = sbr.rel (0) target = $region25
    $region24: #{basic_linear_model_forward.1} parent=1 // pred_region
      _
    $region25: #{basic_linear_model_forward.1} parent=1 // pred_fallthru
      _
    // Predicated region
    $region26: #{basic_linear_model_forward.1} parent=1 // pred_check
      _
    $region27: #{basic_linear_model_forward.1} parent=1 // pred_check_branch
      %26 = sbr.rel (0) target = $region29
    $region28: #{basic_linear_model_forward.1} parent=1 // pred_region
      _
    $region29: #{basic_linear_model_forward.1} parent=1 // pred_fallthru
      _
    %v28 = vld [vmem:[%s0] sm:$0xff]
    %v29 = vld [vmem:[%s0 + $0x8] sm:$0xff]
    %v30 = vld [vmem:[%s0 + $0x10] sm:$0xff]
    %v31 = vld [vmem:[%s0 + $0x18] sm:$0xff]
    %v32 = vld [vmem:[%s0 + $0x20] sm:$0xff]
    %v33 = vld [vmem:[%s0 + $0x28] sm:$0xff]
    %v34 = vld [vmem:[%s0 + $0x30] sm:$0xff]
    %v35 = vpack.c.bf16 %v28, %v28
    %v36 = vpack.c.bf16 %v29, %v29
    %v37 = vpack.c.bf16 %v30, %v30
    %v38 = vpack.c.bf16 %v31, %v31
    %v39 = vpack.c.bf16 %v32, %v32
    %v40 = vpack.c.bf16 %v33, %v33
    %v41 = vpack.c.bf16 %v34, %v34
    %v42 = vld [vmem:[%s1] sm:$0xff]
    %v43 = vld [vmem:[%s1 + $0x8] sm:$0xf]
    %v44 = vld [vmem:[%s1 + $0xc] sm:$0xff]
    %v45 = vld [vmem:[%s1 + $0x14] sm:$0xf]
    %v46 = vld [vmem:[%s1 + $0x18] sm:$0xff]
    %v47 = vld [vmem:[%s1 + $0x20] sm:$0xf]
    %v48 = vld [vmem:[%s1 + $0x24] sm:$0xff]
    %v49 = vld [vmem:[%s1 + $0x2c] sm:$0xf]
    %v50 = vld [vmem:[%s1 + $0x30] sm:$0xff]
    %v51 = vld [vmem:[%s1 + $0x38] sm:$0xf]
    %v52 = vld [vmem:[%s1 + $0x3c] sm:$0xff]
    %v53 = vld [vmem:[%s1 + $0x44] sm:$0xf]
    %v54 = vld [vmem:[%s1 + $0x48] sm:$0xff]
    %v55 = vld [vmem:[%s1 + $0x50] sm:$0xf]
    %v56 = vld [vmem:[%s1 + $0x54] sm:$0xff]
    %v57 = vld [vmem:[%s1 + $0x5c] sm:$0xf]
    %v58 = vld [vmem:[%s1 + $0x60] sm:$0xff]
    %v59 = vld [vmem:[%s1 + $0x68] sm:$0xf]
    %v60 = vld [vmem:[%s1 + $0x6c] sm:$0xff]
    %v61 = vld [vmem:[%s1 + $0x74] sm:$0xf]
    %v62 = vld [vmem:[%s1 + $0x78] sm:$0xff]
    %v63 = vld [vmem:[%s1 + $0x80] sm:$0xf]
    %v64 = vld [vmem:[%s1 + $0x84] sm:$0xff]
    %v65 = vld [vmem:[%s1 + $0x8c] sm:$0xf]
    %v66 = vld [vmem:[%s1 + $0x90] sm:$0xff]
    %v67 = vld [vmem:[%s1 + $0x98] sm:$0xf]
    %v68 = vld [vmem:[%s1 + $0x9c] sm:$0xff]
    %v69 = vld [vmem:[%s1 + $0xa4] sm:$0xf]
    %v70 = vld [vmem:[%s1 + $0xa8] sm:$0xff]
    %v71 = vld [vmem:[%s1 + $0xb0] sm:$0xf]
    %v72 = vld [vmem:[%s1 + $0xb4] sm:$0xff]
    %v73 = vld [vmem:[%s1 + $0xbc] sm:$0xf]
    %v74 = vld [vmem:[%s1 + $0xc0] sm:$0xff]
    %v75 = vld [vmem:[%s1 + $0xc8] sm:$0xf]
    %v76 = vld [vmem:[%s1 + $0xcc] sm:$0xff]
    %v77 = vld [vmem:[%s1 + $0xd4] sm:$0xf]
    %v78 = vld [vmem:[%s1 + $0xd8] sm:$0xff]
    %v79 = vld [vmem:[%s1 + $0xe0] sm:$0xf]
    %v80 = vld [vmem:[%s1 + $0xe4] sm:$0xff]
    %v81 = vld [vmem:[%s1 + $0xec] sm:$0xf]
    %v82 = vld [vmem:[%s1 + $0xf0] sm:$0xff]
    %v83 = vld [vmem:[%s1 + $0xf8] sm:$0xf]
    %v84 = vld [vmem:[%s1 + $0xfc] sm:$0xff]
    %v85 = vld [vmem:[%s1 + $0x104] sm:$0xf]
    %v86 = vld [vmem:[%s1 + $0x108] sm:$0xff]
    %v87 = vld [vmem:[%s1 + $0x110] sm:$0xf]
    %v88 = vld [vmem:[%s1 + $0x114] sm:$0xff]
    %v89 = vld [vmem:[%s1 + $0x11c] sm:$0xf]
    %v90 = vld [vmem:[%s1 + $0x120] sm:$0xff]
    %v91 = vld [vmem:[%s1 + $0x128] sm:$0xf]
    %v92 = vld [vmem:[%s1 + $0x12c] sm:$0xff]
    %v93 = vld [vmem:[%s1 + $0x134] sm:$0xf]
    %v94 = vld [vmem:[%s1 + $0x138] sm:$0xff]
    %v95 = vld [vmem:[%s1 + $0x140] sm:$0xf]
    %v96 = vld [vmem:[%s1 + $0x144] sm:$0xff]
    %v97 = vld [vmem:[%s1 + $0x14c] sm:$0xf]
    %v98 = vld [vmem:[%s1 + $0x150] sm:$0xff]
    %v99 = vld [vmem:[%s1 + $0x158] sm:$0xf]
    %v100 = vld [vmem:[%s1 + $0x15c] sm:$0xff]
    %v101 = vld [vmem:[%s1 + $0x164] sm:$0xf]
    %v102 = vld [vmem:[%s1 + $0x168] sm:$0xff]
    %v103 = vld [vmem:[%s1 + $0x170] sm:$0xf]
    %v104 = vld [vmem:[%s1 + $0x174] sm:$0xff]
    %v105 = vld [vmem:[%s1 + $0x17c] sm:$0xf]
    %v106 = vld [vmem:[%s1 + $0x180] sm:$0xff]
    %v107 = vld [vmem:[%s1 + $0x188] sm:$0xf]
    %v108 = vld [vmem:[%s1 + $0x18c] sm:$0xff]
    %v109 = vld [vmem:[%s1 + $0x194] sm:$0xf]
    %v110 = vld [vmem:[%s1 + $0x198] sm:$0xff]
    %v111 = vld [vmem:[%s1 + $0x1a0] sm:$0xf]
    %v112 = vld [vmem:[%s1 + $0x1a4] sm:$0xff]
    %v113 = vld [vmem:[%s1 + $0x1ac] sm:$0xf]
    %v114 = vld [vmem:[%s1 + $0x1b0] sm:$0xff]
    %v115 = vld [vmem:[%s1 + $0x1b8] sm:$0xf]
    %v116 = vld [vmem:[%s1 + $0x1bc] sm:$0xff]
    %v117 = vld [vmem:[%s1 + $0x1c4] sm:$0xf]
    %v118 = vld [vmem:[%s1 + $0x1c8] sm:$0xff]
    %v119 = vld [vmem:[%s1 + $0x1d0] sm:$0xf]
    %v120 = vld [vmem:[%s1 + $0x1d4] sm:$0xff]
    %v121 = vld [vmem:[%s1 + $0x1dc] sm:$0xf]
    %v122 = vld [vmem:[%s1 + $0x1e0] sm:$0xff]
    %v123 = vld [vmem:[%s1 + $0x1e8] sm:$0xf]
    %v124 = vld [vmem:[%s1 + $0x1ec] sm:$0xff]
    %v125 = vld [vmem:[%s1 + $0x1f4] sm:$0xf]
    %v126 = vld [vmem:[%s1 + $0x1f8] sm:$0xff]
    %v127 = vld [vmem:[%s1 + $0x200] sm:$0xf]
    %v128 = vld [vmem:[%s1 + $0x204] sm:$0xff]
    %v129 = vld [vmem:[%s1 + $0x20c] sm:$0xf]
    %v130 = vld [vmem:[%s1 + $0x210] sm:$0xff]
    %v131 = vld [vmem:[%s1 + $0x218] sm:$0xf]
    %v132 = vld [vmem:[%s1 + $0x21c] sm:$0xff]
    %v133 = vld [vmem:[%s1 + $0x224] sm:$0xf]
    %v134 = vld [vmem:[%s1 + $0x228] sm:$0xff]
    %v135 = vld [vmem:[%s1 + $0x230] sm:$0xf]
    %v136 = vld [vmem:[%s1 + $0x234] sm:$0xff]
    %v137 = vld [vmem:[%s1 + $0x23c] sm:$0xf]
    %v138 = vld [vmem:[%s1 + $0x240] sm:$0xff]
    %v139 = vld [vmem:[%s1 + $0x248] sm:$0xf]
    %v140 = vld [vmem:[%s1 + $0x24c] sm:$0xff]
    %v141 = vld [vmem:[%s1 + $0x254] sm:$0xf]
    %v142 = vld [vmem:[%s1 + $0x258] sm:$0xff]
    %v143 = vld [vmem:[%s1 + $0x260] sm:$0xf]
    %v144 = vld [vmem:[%s1 + $0x264] sm:$0xff]
    %v145 = vld [vmem:[%s1 + $0x26c] sm:$0xf]
    %v146 = vld [vmem:[%s1 + $0x270] sm:$0xff]
    %v147 = vld [vmem:[%s1 + $0x278] sm:$0xf]
    %v148 = vld [vmem:[%s1 + $0x27c] sm:$0xff]
    %v149 = vld [vmem:[%s1 + $0x284] sm:$0xf]
    %v150 = vld [vmem:[%s1 + $0x288] sm:$0xff]
    %v151 = vld [vmem:[%s1 + $0x290] sm:$0xf]
    %v152 = vld [vmem:[%s1 + $0x294] sm:$0xff]
    %v153 = vld [vmem:[%s1 + $0x29c] sm:$0xf]
    %v154 = vld [vmem:[%s1 + $0x2a0] sm:$0xff]
    %v155 = vld [vmem:[%s1 + $0x2a8] sm:$0xf]
    %v156 = vld [vmem:[%s1 + $0x2ac] sm:$0xff]
    %v157 = vld [vmem:[%s1 + $0x2b4] sm:$0xf]
    %v158 = vld [vmem:[%s1 + $0x2b8] sm:$0xff]
    %v159 = vld [vmem:[%s1 + $0x2c0] sm:$0xf]
    %v160 = vld [vmem:[%s1 + $0x2c4] sm:$0xff]
    %v161 = vld [vmem:[%s1 + $0x2cc] sm:$0xf]
    %v162 = vld [vmem:[%s1 + $0x2d0] sm:$0xff]
    %v163 = vld [vmem:[%s1 + $0x2d8] sm:$0xf]
    %v164 = vld [vmem:[%s1 + $0x2dc] sm:$0xff]
    %v165 = vld [vmem:[%s1 + $0x2e4] sm:$0xf]
    %v166 = vld [vmem:[%s1 + $0x2e8] sm:$0xff]
    %v167 = vld [vmem:[%s1 + $0x2f0] sm:$0xf]
    %v168 = vld [vmem:[%s1 + $0x2f4] sm:$0xff]
    %v169 = vld [vmem:[%s1 + $0x2fc] sm:$0xf]
    %v170 = vld [vmem:[%s1 + $0x300] sm:$0xff]
    %v171 = vld [vmem:[%s1 + $0x308] sm:$0xf]
    %v172 = vld [vmem:[%s1 + $0x30c] sm:$0xff]
    %v173 = vld [vmem:[%s1 + $0x314] sm:$0xf]
    %v174 = vld [vmem:[%s1 + $0x318] sm:$0xff]
    %v175 = vld [vmem:[%s1 + $0x320] sm:$0xf]
    %v176 = vld [vmem:[%s1 + $0x324] sm:$0xff]
    %v177 = vld [vmem:[%s1 + $0x32c] sm:$0xf]
    %v178 = vld [vmem:[%s1 + $0x330] sm:$0xff]
    %v179 = vld [vmem:[%s1 + $0x338] sm:$0xf]
    %v180 = vld [vmem:[%s1 + $0x33c] sm:$0xff]
    %v181 = vld [vmem:[%s1 + $0x344] sm:$0xf]
    %v182 = vld [vmem:[%s1 + $0x348] sm:$0xff]
    %v183 = vld [vmem:[%s1 + $0x350] sm:$0xf]
    %v184 = vld [vmem:[%s1 + $0x354] sm:$0xff]
    %v185 = vld [vmem:[%s1 + $0x35c] sm:$0xf]
    %v186 = vld [vmem:[%s1 + $0x360] sm:$0xff]
    %v187 = vld [vmem:[%s1 + $0x368] sm:$0xf]
    %v188 = vld [vmem:[%s1 + $0x36c] sm:$0xff]
    %v189 = vld [vmem:[%s1 + $0x374] sm:$0xf]
    %v190 = vld [vmem:[%s1 + $0x378] sm:$0xff]
    %v191 = vld [vmem:[%s1 + $0x380] sm:$0xf]
    %v192 = vld [vmem:[%s1 + $0x384] sm:$0xff]
    %v193 = vld [vmem:[%s1 + $0x38c] sm:$0xf]
    %v194 = vld [vmem:[%s1 + $0x390] sm:$0xff]
    %v195 = vld [vmem:[%s1 + $0x398] sm:$0xf]
    %v196 = vld [vmem:[%s1 + $0x39c] sm:$0xff]
    %v197 = vld [vmem:[%s1 + $0x3a4] sm:$0xf]
    %v198 = vld [vmem:[%s1 + $0x3a8] sm:$0xff]
    %v199 = vld [vmem:[%s1 + $0x3b0] sm:$0xf]
    %v200 = vld [vmem:[%s1 + $0x3b4] sm:$0xff]
    %v201 = vld [vmem:[%s1 + $0x3bc] sm:$0xf]
    %v202 = vld [vmem:[%s1 + $0x3c0] sm:$0xff]
    %v203 = vld [vmem:[%s1 + $0x3c8] sm:$0xf]
    %v204 = vld [vmem:[%s1 + $0x3cc] sm:$0xff]
    %v205 = vld [vmem:[%s1 + $0x3d4] sm:$0xf]
    %v206 = vld [vmem:[%s1 + $0x3d8] sm:$0xff]
    %v207 = vld [vmem:[%s1 + $0x3e0] sm:$0xf]
    %v208 = vld [vmem:[%s1 + $0x3e4] sm:$0xff]
    %v209 = vld [vmem:[%s1 + $0x3ec] sm:$0xf]
    %v210 = vld [vmem:[%s1 + $0x3f0] sm:$0xff]
    %v211 = vld [vmem:[%s1 + $0x3f8] sm:$0xf]
    %v212 = vld [vmem:[%s1 + $0x3fc] sm:$0xff]
    %v213 = vld [vmem:[%s1 + $0x404] sm:$0xf]
    %v214 = vld [vmem:[%s1 + $0x408] sm:$0xff]
    %v215 = vld [vmem:[%s1 + $0x410] sm:$0xf]
    %v216 = vld [vmem:[%s1 + $0x414] sm:$0xff]
    %v217 = vld [vmem:[%s1 + $0x41c] sm:$0xf]
    %v218 = vld [vmem:[%s1 + $0x420] sm:$0xff]
    %v219 = vld [vmem:[%s1 + $0x428] sm:$0xf]
    %v220 = vld [vmem:[%s1 + $0x42c] sm:$0xff]
    %v221 = vld [vmem:[%s1 + $0x434] sm:$0xf]
    %v222 = vld [vmem:[%s1 + $0x438] sm:$0xff]
    %v223 = vld [vmem:[%s1 + $0x440] sm:$0xf]
    %v224 = vld [vmem:[%s1 + $0x444] sm:$0xff]
    %v225 = vld [vmem:[%s1 + $0x44c] sm:$0xf]
    %v226 = vld [vmem:[%s1 + $0x450] sm:$0xff]
    %v227 = vld [vmem:[%s1 + $0x458] sm:$0xf]
    %v228 = vld [vmem:[%s1 + $0x45c] sm:$0xff]
    %v229 = vld [vmem:[%s1 + $0x464] sm:$0xf]
    %v230 = vld [vmem:[%s1 + $0x468] sm:$0xff]
    %v231 = vld [vmem:[%s1 + $0x470] sm:$0xf]
    %v232 = vld [vmem:[%s1 + $0x474] sm:$0xff]
    %v233 = vld [vmem:[%s1 + $0x47c] sm:$0xf]
    %v234 = vld [vmem:[%s1 + $0x480] sm:$0xff]
    %v235 = vld [vmem:[%s1 + $0x488] sm:$0xf]
    %v236 = vld [vmem:[%s1 + $0x48c] sm:$0xff]
    %v237 = vld [vmem:[%s1 + $0x494] sm:$0xf]
    %v238 = vld [vmem:[%s2] sm:$0x7]
    %v240 = vlaneseq
    %v241 = vshrl.u32 %v240, 7
    %v242 = vsub.s32 0, %v241
    %v243 = vrot.slane %v238, %v242
    %v244 = vlaneseq
    %v245 = vshrl.u32 %v244, 7
    %v246 = vsub.s32 1, %v245
    %v247 = vrot.slane %v238, %v246
    %v248 = vlaneseq
    %v249 = vshrl.u32 %v248, 7
    %v250 = vsub.s32 2, %v249
    %v251 = vrot.slane %v238, %v250
    %v451 = vunpack.c.l.b16 %v42
    %v452 = vunpack.c.h.b16 %v42
    %v453 = vunpack.c.l.b16 %v43
    %v454 = vunpack.c.l.b16 %v44
    %v455 = vunpack.c.h.b16 %v44
    %v456 = vunpack.c.l.b16 %v45
    %v457 = vunpack.c.l.b16 %v46
    %v458 = vunpack.c.h.b16 %v46
    %v459 = vunpack.c.l.b16 %v47
    %v460 = vunpack.c.l.b16 %v48
    %v461 = vunpack.c.h.b16 %v48
    %v462 = vunpack.c.l.b16 %v49
    %v463 = vunpack.c.l.b16 %v50
    %v464 = vunpack.c.h.b16 %v50
    %v465 = vunpack.c.l.b16 %v51
    %v466 = vunpack.c.l.b16 %v52
    %v467 = vunpack.c.h.b16 %v52
    %v468 = vunpack.c.l.b16 %v53
    %v469 = vunpack.c.l.b16 %v54
    %v470 = vunpack.c.h.b16 %v54
    %v471 = vunpack.c.l.b16 %v55
    %v472 = vunpack.c.l.b16 %v56
    %v473 = vunpack.c.h.b16 %v56
    %v474 = vunpack.c.l.b16 %v57
    %v475 = vunpack.c.l.b16 %v58
    %v476 = vunpack.c.h.b16 %v58
    %v477 = vunpack.c.l.b16 %v59
    %v478 = vunpack.c.l.b16 %v60
    %v479 = vunpack.c.h.b16 %v60
    %v480 = vunpack.c.l.b16 %v61
    %v481 = vunpack.c.l.b16 %v62
    %v482 = vunpack.c.h.b16 %v62
    %v483 = vunpack.c.l.b16 %v63
    %v484 = vunpack.c.l.b16 %v64
    %v485 = vunpack.c.h.b16 %v64
    %v486 = vunpack.c.l.b16 %v65
    %v487 = vunpack.c.l.b16 %v66
    %v488 = vunpack.c.h.b16 %v66
    %v489 = vunpack.c.l.b16 %v67
    %v490 = vunpack.c.l.b16 %v68
    %v491 = vunpack.c.h.b16 %v68
    %v492 = vunpack.c.l.b16 %v69
    %v493 = vunpack.c.l.b16 %v70
    %v494 = vunpack.c.h.b16 %v70
    %v495 = vunpack.c.l.b16 %v71
    %v496 = vunpack.c.l.b16 %v72
    %v497 = vunpack.c.h.b16 %v72
    %v498 = vunpack.c.l.b16 %v73
    %v499 = vunpack.c.l.b16 %v74
    %v500 = vunpack.c.h.b16 %v74
    %v501 = vunpack.c.l.b16 %v75
    %v502 = vunpack.c.l.b16 %v76
    %v503 = vunpack.c.h.b16 %v76
    %v504 = vunpack.c.l.b16 %v77
    %v505 = vunpack.c.l.b16 %v78
    %v506 = vunpack.c.h.b16 %v78
    %v507 = vunpack.c.l.b16 %v79
    %v508 = vunpack.c.l.b16 %v80
    %v509 = vunpack.c.h.b16 %v80
    %v510 = vunpack.c.l.b16 %v81
    %v511 = vunpack.c.l.b16 %v82
    %v512 = vunpack.c.h.b16 %v82
    %v513 = vunpack.c.l.b16 %v83
    %v514 = vunpack.c.l.b16 %v84
    %v515 = vunpack.c.h.b16 %v84
    %v516 = vunpack.c.l.b16 %v85
    %v517 = vunpack.c.l.b16 %v86
    %v518 = vunpack.c.h.b16 %v86
    %v519 = vunpack.c.l.b16 %v87
    %v520 = vunpack.c.l.b16 %v88
    %v521 = vunpack.c.h.b16 %v88
    %v522 = vunpack.c.l.b16 %v89
    %v523 = vunpack.c.l.b16 %v90
    %v524 = vunpack.c.h.b16 %v90
    %v525 = vunpack.c.l.b16 %v91
    %v526 = vunpack.c.l.b16 %v92
    %v527 = vunpack.c.h.b16 %v92
    %v528 = vunpack.c.l.b16 %v93
    %v529 = vunpack.c.l.b16 %v94
    %v530 = vunpack.c.h.b16 %v94
    %v531 = vunpack.c.l.b16 %v95
    %v532 = vunpack.c.l.b16 %v96
    %v533 = vunpack.c.h.b16 %v96
    %v534 = vunpack.c.l.b16 %v97
    %v535 = vunpack.c.l.b16 %v98
    %v536 = vunpack.c.h.b16 %v98
    %v537 = vunpack.c.l.b16 %v99
    %v538 = vunpack.c.l.b16 %v100
    %v539 = vunpack.c.h.b16 %v100
    %v540 = vunpack.c.l.b16 %v101
    %v541 = vunpack.c.l.b16 %v102
    %v542 = vunpack.c.h.b16 %v102
    %v543 = vunpack.c.l.b16 %v103
    %v544 = vunpack.c.l.b16 %v104
    %v545 = vunpack.c.h.b16 %v104
    %v546 = vunpack.c.l.b16 %v105
    %v547 = vunpack.c.l.b16 %v106
    %v548 = vunpack.c.h.b16 %v106
    %v549 = vunpack.c.l.b16 %v107
    %v550 = vunpack.c.l.b16 %v108
    %v551 = vunpack.c.h.b16 %v108
    %v552 = vunpack.c.l.b16 %v109
    %v553 = vunpack.c.l.b16 %v110
    %v554 = vunpack.c.h.b16 %v110
    %v555 = vunpack.c.l.b16 %v111
    %v556 = vunpack.c.l.b16 %v112
    %v557 = vunpack.c.h.b16 %v112
    %v558 = vunpack.c.l.b16 %v113
    %v559 = vunpack.c.l.b16 %v114
    %v560 = vunpack.c.h.b16 %v114
    %v561 = vunpack.c.l.b16 %v115
    %v562 = vunpack.c.l.b16 %v116
    %v563 = vunpack.c.h.b16 %v116
    %v564 = vunpack.c.l.b16 %v117
    %v565 = vunpack.c.l.b16 %v118
    %v566 = vunpack.c.h.b16 %v118
    %v567 = vunpack.c.l.b16 %v119
    %v568 = vunpack.c.l.b16 %v120
    %v569 = vunpack.c.h.b16 %v120
    %v570 = vunpack.c.l.b16 %v121
    %v571 = vunpack.c.l.b16 %v122
    %v572 = vunpack.c.h.b16 %v122
    %v573 = vunpack.c.l.b16 %v123
    %v574 = vunpack.c.l.b16 %v124
    %v575 = vunpack.c.h.b16 %v124
    %v576 = vunpack.c.l.b16 %v125
    %v577 = vunpack.c.l.b16 %v126
    %v578 = vunpack.c.h.b16 %v126
    %v579 = vunpack.c.l.b16 %v127
    %v580 = vunpack.c.l.b16 %v128
    %v581 = vunpack.c.h.b16 %v128
    %v582 = vunpack.c.l.b16 %v129
    %v583 = vunpack.c.l.b16 %v130
    %v584 = vunpack.c.h.b16 %v130
    %v585 = vunpack.c.l.b16 %v131
    %v586 = vunpack.c.l.b16 %v132
    %v587 = vunpack.c.h.b16 %v132
    %v588 = vunpack.c.l.b16 %v133
    %v589 = vunpack.c.l.b16 %v134
    %v590 = vunpack.c.h.b16 %v134
    %v591 = vunpack.c.l.b16 %v135
    %v592 = vunpack.c.l.b16 %v136
    %v593 = vunpack.c.h.b16 %v136
    %v594 = vunpack.c.l.b16 %v137
    %v595 = vunpack.c.l.b16 %v138
    %v596 = vunpack.c.h.b16 %v138
    %v597 = vunpack.c.l.b16 %v139
    %v598 = vunpack.c.l.b16 %v140
    %v599 = vunpack.c.h.b16 %v140
    %v600 = vunpack.c.l.b16 %v141
    %v601 = vunpack.c.l.b16 %v142
    %v602 = vunpack.c.h.b16 %v142
    %v603 = vunpack.c.l.b16 %v143
    %v604 = vunpack.c.l.b16 %v144
    %v605 = vunpack.c.h.b16 %v144
    %v606 = vunpack.c.l.b16 %v145
    %v607 = vunpack.c.l.b16 %v146
    %v608 = vunpack.c.h.b16 %v146
    %v609 = vunpack.c.l.b16 %v147
    %v610 = vunpack.c.l.b16 %v148
    %v611 = vunpack.c.h.b16 %v148
    %v612 = vunpack.c.l.b16 %v149
    %v613 = vunpack.c.l.b16 %v150
    %v614 = vunpack.c.h.b16 %v150
    %v615 = vunpack.c.l.b16 %v151
    %v616 = vunpack.c.l.b16 %v152
    %v617 = vunpack.c.h.b16 %v152
    %v618 = vunpack.c.l.b16 %v153
    %v619 = vunpack.c.l.b16 %v154
    %v620 = vunpack.c.h.b16 %v154
    %v621 = vunpack.c.l.b16 %v155
    %v622 = vunpack.c.l.b16 %v156
    %v623 = vunpack.c.h.b16 %v156
    %v624 = vunpack.c.l.b16 %v157
    %v625 = vunpack.c.l.b16 %v158
    %v626 = vunpack.c.h.b16 %v158
    %v627 = vunpack.c.l.b16 %v159
    %v628 = vunpack.c.l.b16 %v160
    %v629 = vunpack.c.h.b16 %v160
    %v630 = vunpack.c.l.b16 %v161
    %v631 = vunpack.c.l.b16 %v162
    %v632 = vunpack.c.h.b16 %v162
    %v633 = vunpack.c.l.b16 %v163
    %v634 = vunpack.c.l.b16 %v164
    %v635 = vunpack.c.h.b16 %v164
    %v636 = vunpack.c.l.b16 %v165
    %v637 = vunpack.c.l.b16 %v166
    %v638 = vunpack.c.h.b16 %v166
    %v639 = vunpack.c.l.b16 %v167
    %v640 = vunpack.c.l.b16 %v168
    %v641 = vunpack.c.h.b16 %v168
    %v642 = vunpack.c.l.b16 %v169
    %v643 = vunpack.c.l.b16 %v170
    %v644 = vunpack.c.h.b16 %v170
    %v645 = vunpack.c.l.b16 %v171
    %v646 = vunpack.c.l.b16 %v172
    %v647 = vunpack.c.h.b16 %v172
    %v648 = vunpack.c.l.b16 %v173
    %v649 = vunpack.c.l.b16 %v174
    %v650 = vunpack.c.h.b16 %v174
    %v651 = vunpack.c.l.b16 %v175
    %v652 = vunpack.c.l.b16 %v176
    %v653 = vunpack.c.h.b16 %v176
    %v654 = vunpack.c.l.b16 %v177
    %v655 = vunpack.c.l.b16 %v178
    %v656 = vunpack.c.h.b16 %v178
    %v657 = vunpack.c.l.b16 %v179
    %v658 = vunpack.c.l.b16 %v180
    %v659 = vunpack.c.h.b16 %v180
    %v660 = vunpack.c.l.b16 %v181
    %v661 = vunpack.c.l.b16 %v182
    %v662 = vunpack.c.h.b16 %v182
    %v663 = vunpack.c.l.b16 %v183
    %v664 = vunpack.c.l.b16 %v184
    %v665 = vunpack.c.h.b16 %v184
    %v666 = vunpack.c.l.b16 %v185
    %v667 = vunpack.c.l.b16 %v186
    %v668 = vunpack.c.h.b16 %v186
    %v669 = vunpack.c.l.b16 %v187
    %v670 = vunpack.c.l.b16 %v188
    %v671 = vunpack.c.h.b16 %v188
    %v672 = vunpack.c.l.b16 %v189
    %v673 = vunpack.c.l.b16 %v190
    %v674 = vunpack.c.h.b16 %v190
    %v675 = vunpack.c.l.b16 %v191
    %v676 = vunpack.c.l.b16 %v192
    %v677 = vunpack.c.h.b16 %v192
    %v678 = vunpack.c.l.b16 %v193
    %v679 = vunpack.c.l.b16 %v194
    %v680 = vunpack.c.h.b16 %v194
    %v681 = vunpack.c.l.b16 %v195
    %v682 = vunpack.c.l.b16 %v196
    %v683 = vunpack.c.h.b16 %v196
    %v684 = vunpack.c.l.b16 %v197
    %v685 = vunpack.c.l.b16 %v198
    %v686 = vunpack.c.h.b16 %v198
    %v687 = vunpack.c.l.b16 %v199
    %v688 = vunpack.c.l.b16 %v200
    %v689 = vunpack.c.h.b16 %v200
    %v690 = vunpack.c.l.b16 %v201
    %v691 = vunpack.c.l.b16 %v202
    %v692 = vunpack.c.h.b16 %v202
    %v693 = vunpack.c.l.b16 %v203
    %v694 = vunpack.c.l.b16 %v204
    %v695 = vunpack.c.h.b16 %v204
    %v696 = vunpack.c.l.b16 %v205
    %v697 = vunpack.c.l.b16 %v206
    %v698 = vunpack.c.h.b16 %v206
    %v699 = vunpack.c.l.b16 %v207
    %v700 = vunpack.c.l.b16 %v208
    %v701 = vunpack.c.h.b16 %v208
    %v702 = vunpack.c.l.b16 %v209
    %v703 = vunpack.c.l.b16 %v210
    %v704 = vunpack.c.h.b16 %v210
    %v705 = vunpack.c.l.b16 %v211
    %v706 = vunpack.c.l.b16 %v212
    %v707 = vunpack.c.h.b16 %v212
    %v708 = vunpack.c.l.b16 %v213
    %v709 = vunpack.c.l.b16 %v214
    %v710 = vunpack.c.h.b16 %v214
    %v711 = vunpack.c.l.b16 %v215
    %v712 = vunpack.c.l.b16 %v216
    %v713 = vunpack.c.h.b16 %v216
    %v714 = vunpack.c.l.b16 %v217
    %v715 = vunpack.c.l.b16 %v218
    %v716 = vunpack.c.h.b16 %v218
    %v717 = vunpack.c.l.b16 %v219
    %v718 = vunpack.c.l.b16 %v220
    %v719 = vunpack.c.h.b16 %v220
    %v720 = vunpack.c.l.b16 %v221
    %v721 = vunpack.c.l.b16 %v222
    %v722 = vunpack.c.h.b16 %v222
    %v723 = vunpack.c.l.b16 %v223
    %v724 = vunpack.c.l.b16 %v224
    %v725 = vunpack.c.h.b16 %v224
    %v726 = vunpack.c.l.b16 %v225
    %v727 = vunpack.c.l.b16 %v226
    %v728 = vunpack.c.h.b16 %v226
    %v729 = vunpack.c.l.b16 %v227
    %v730 = vunpack.c.l.b16 %v228
    %v731 = vunpack.c.h.b16 %v228
    %v732 = vunpack.c.l.b16 %v229
    %v733 = vunpack.c.l.b16 %v230
    %v734 = vunpack.c.h.b16 %v230
    %v735 = vunpack.c.l.b16 %v231
    %v736 = vunpack.c.l.b16 %v232
    %v737 = vunpack.c.h.b16 %v232
    %v738 = vunpack.c.l.b16 %v233
    %v739 = vunpack.c.l.b16 %v234
    %v740 = vunpack.c.h.b16 %v234
    %v741 = vunpack.c.l.b16 %v235
    %v742 = vunpack.c.l.b16 %v236
    %v743 = vunpack.c.h.b16 %v236
    %v744 = vunpack.c.l.b16 %v237
    %v745 = vpack.c.b16 %v454, %v451
    %v746 = vpack.c.b16 %v455, %v452
    %v747 = vpack.c.b16 %v456, %v453
    %v748 = vpack.c.b16 %v460, %v457
    %v749 = vpack.c.b16 %v461, %v458
    %v750 = vpack.c.b16 %v462, %v459
    %v751 = vpack.c.b16 %v466, %v463
    %v752 = vpack.c.b16 %v467, %v464
    %v753 = vpack.c.b16 %v468, %v465
    %v754 = vpack.c.b16 %v472, %v469
    %v755 = vpack.c.b16 %v473, %v470
    %v756 = vpack.c.b16 %v474, %v471
    %v757 = vpack.c.b16 %v478, %v475
    %v758 = vpack.c.b16 %v479, %v476
    %v759 = vpack.c.b16 %v480, %v477
    %v760 = vpack.c.b16 %v484, %v481
    %v761 = vpack.c.b16 %v485, %v482
    %v762 = vpack.c.b16 %v486, %v483
    %v763 = vpack.c.b16 %v490, %v487
    %v764 = vpack.c.b16 %v491, %v488
    %v765 = vpack.c.b16 %v492, %v489
    %v766 = vpack.c.b16 %v496, %v493
    %v767 = vpack.c.b16 %v497, %v494
    %v768 = vpack.c.b16 %v498, %v495
    %v769 = vpack.c.b16 %v502, %v499
    %v770 = vpack.c.b16 %v503, %v500
    %v771 = vpack.c.b16 %v504, %v501
    %v772 = vpack.c.b16 %v508, %v505
    %v773 = vpack.c.b16 %v509, %v506
    %v774 = vpack.c.b16 %v510, %v507
    %v775 = vpack.c.b16 %v514, %v511
    %v776 = vpack.c.b16 %v515, %v512
    %v777 = vpack.c.b16 %v516, %v513
    %v778 = vpack.c.b16 %v520, %v517
    %v779 = vpack.c.b16 %v521, %v518
    %v780 = vpack.c.b16 %v522, %v519
    %v781 = vpack.c.b16 %v526, %v523
    %v782 = vpack.c.b16 %v527, %v524
    %v783 = vpack.c.b16 %v528, %v525
    %v784 = vpack.c.b16 %v532, %v529
    %v785 = vpack.c.b16 %v533, %v530
    %v786 = vpack.c.b16 %v534, %v531
    %v787 = vpack.c.b16 %v538, %v535
    %v788 = vpack.c.b16 %v539, %v536
    %v789 = vpack.c.b16 %v540, %v537
    %v790 = vpack.c.b16 %v544, %v541
    %v791 = vpack.c.b16 %v545, %v542
    %v792 = vpack.c.b16 %v546, %v543
    %v793 = vpack.c.b16 %v550, %v547
    %v794 = vpack.c.b16 %v551, %v548
    %v795 = vpack.c.b16 %v552, %v549
    %v796 = vpack.c.b16 %v556, %v553
    %v797 = vpack.c.b16 %v557, %v554
    %v798 = vpack.c.b16 %v558, %v555
    %v799 = vpack.c.b16 %v562, %v559
    %v800 = vpack.c.b16 %v563, %v560
    %v801 = vpack.c.b16 %v564, %v561
    %v802 = vpack.c.b16 %v568, %v565
    %v803 = vpack.c.b16 %v569, %v566
    %v804 = vpack.c.b16 %v570, %v567
    %v805 = vpack.c.b16 %v574, %v571
    %v806 = vpack.c.b16 %v575, %v572
    %v807 = vpack.c.b16 %v576, %v573
    %v808 = vpack.c.b16 %v580, %v577
    %v809 = vpack.c.b16 %v581, %v578
    %v810 = vpack.c.b16 %v582, %v579
    %v811 = vpack.c.b16 %v586, %v583
    %v812 = vpack.c.b16 %v587, %v584
    %v813 = vpack.c.b16 %v588, %v585
    %v814 = vpack.c.b16 %v592, %v589
    %v815 = vpack.c.b16 %v593, %v590
    %v816 = vpack.c.b16 %v594, %v591
    %v817 = vpack.c.b16 %v598, %v595
    %v818 = vpack.c.b16 %v599, %v596
    %v819 = vpack.c.b16 %v600, %v597
    %v820 = vpack.c.b16 %v604, %v601
    %v821 = vpack.c.b16 %v605, %v602
    %v822 = vpack.c.b16 %v606, %v603
    %v823 = vpack.c.b16 %v610, %v607
    %v824 = vpack.c.b16 %v611, %v608
    %v825 = vpack.c.b16 %v612, %v609
    %v826 = vpack.c.b16 %v616, %v613
    %v827 = vpack.c.b16 %v617, %v614
    %v828 = vpack.c.b16 %v618, %v615
    %v829 = vpack.c.b16 %v622, %v619
    %v830 = vpack.c.b16 %v623, %v620
    %v831 = vpack.c.b16 %v624, %v621
    %v832 = vpack.c.b16 %v628, %v625
    %v833 = vpack.c.b16 %v629, %v626
    %v834 = vpack.c.b16 %v630, %v627
    %v835 = vpack.c.b16 %v634, %v631
    %v836 = vpack.c.b16 %v635, %v632
    %v837 = vpack.c.b16 %v636, %v633
    %v838 = vpack.c.b16 %v640, %v637
    %v839 = vpack.c.b16 %v641, %v638
    %v840 = vpack.c.b16 %v642, %v639
    %v841 = vpack.c.b16 %v646, %v643
    %v842 = vpack.c.b16 %v647, %v644
    %v843 = vpack.c.b16 %v648, %v645
    %v844 = vpack.c.b16 %v652, %v649
    %v845 = vpack.c.b16 %v653, %v650
    %v846 = vpack.c.b16 %v654, %v651
    %v847 = vpack.c.b16 %v658, %v655
    %v848 = vpack.c.b16 %v659, %v656
    %v849 = vpack.c.b16 %v660, %v657
    %v850 = vpack.c.b16 %v664, %v661
    %v851 = vpack.c.b16 %v665, %v662
    %v852 = vpack.c.b16 %v666, %v663
    %v853 = vpack.c.b16 %v670, %v667
    %v854 = vpack.c.b16 %v671, %v668
    %v855 = vpack.c.b16 %v672, %v669
    %v856 = vpack.c.b16 %v676, %v673
    %v857 = vpack.c.b16 %v677, %v674
    %v858 = vpack.c.b16 %v678, %v675
    %v859 = vpack.c.b16 %v682, %v679
    %v860 = vpack.c.b16 %v683, %v680
    %v861 = vpack.c.b16 %v684, %v681
    %v862 = vpack.c.b16 %v688, %v685
    %v863 = vpack.c.b16 %v689, %v686
    %v864 = vpack.c.b16 %v690, %v687
    %v865 = vpack.c.b16 %v694, %v691
    %v866 = vpack.c.b16 %v695, %v692
    %v867 = vpack.c.b16 %v696, %v693
    %v868 = vpack.c.b16 %v700, %v697
    %v869 = vpack.c.b16 %v701, %v698
    %v870 = vpack.c.b16 %v702, %v699
    %v871 = vpack.c.b16 %v706, %v703
    %v872 = vpack.c.b16 %v707, %v704
    %v873 = vpack.c.b16 %v708, %v705
    %v874 = vpack.c.b16 %v712, %v709
    %v875 = vpack.c.b16 %v713, %v710
    %v876 = vpack.c.b16 %v714, %v711
    %v877 = vpack.c.b16 %v718, %v715
    %v878 = vpack.c.b16 %v719, %v716
    %v879 = vpack.c.b16 %v720, %v717
    %v880 = vpack.c.b16 %v724, %v721
    %v881 = vpack.c.b16 %v725, %v722
    %v882 = vpack.c.b16 %v726, %v723
    %v883 = vpack.c.b16 %v730, %v727
    %v884 = vpack.c.b16 %v731, %v728
    %v885 = vpack.c.b16 %v732, %v729
    %v886 = vpack.c.b16 %v736, %v733
    %v887 = vpack.c.b16 %v737, %v734
    %v888 = vpack.c.b16 %v738, %v735
    %v889 = vpack.c.b16 %v742, %v739
    %v890 = vpack.c.b16 %v743, %v740
    %v891 = vpack.c.b16 %v744, %v741
    %vm1039 = vcmask 130048
    %v1041 = vsel %vm1039, %v41, 0
    %1043 = vmatprep.subr.bf16.mxu0 %v746
    %1044 = vmatpush1.bf16.msra.mxu0 %v745
    %1045 = vmatprep.subr.bf16.mxu0 %v749
    %1046 = vmatpush1.bf16.msra.mxu0 %v748
    %1047 = vmatprep.subr.bf16.mxu0 %v752
    %1048 = vmatpush1.bf16.msra.mxu0 %v751
    %1049 = vmatprep.subr.bf16.mxu0 %v755
    %1050 = vmatpush1.bf16.msra.mxu0 %v754
    %1051 = vmatprep.subr.bf16.mxu0 %v758
    %1052 = vmatpush1.bf16.msra.mxu0 %v757
    %1053 = vmatprep.subr.bf16.mxu0 %v761
    %1054 = vmatpush1.bf16.msra.mxu0 %v760
    %1055 = vmatprep.subr.bf16.mxu0 %v764
    %1056 = vmatpush1.bf16.msra.mxu0 %v763
    %1057 = vmatprep.subr.bf16.mxu0 %v767
    %1058 = vmatpush1.bf16.msra.mxu0 %v766
    %1059 = vmatprep.subr.bf16.mxu0 %v770
    %1060 = vmatpush1.bf16.msra.mxu0 %v769
    %1061 = vmatprep.subr.bf16.mxu0 %v773
    %1062 = vmatpush1.bf16.msra.mxu0 %v772
    %1063 = vmatprep.subr.bf16.mxu0 %v776
    %1064 = vmatpush1.bf16.msra.mxu0 %v775
    %1065 = vmatprep.subr.bf16.mxu0 %v779
    %1066 = vmatpush1.bf16.msra.mxu0 %v778
    %1067 = vmatprep.subr.bf16.mxu0 %v782
    %1068 = vmatpush1.bf16.msra.mxu0 %v781
    %1069 = vmatprep.subr.bf16.mxu0 %v785
    %1070 = vmatpush1.bf16.msra.mxu0 %v784
    %1071 = vmatprep.subr.bf16.mxu0 %v788
    %1072 = vmatpush1.bf16.msra.mxu0 %v787
    %1073 = vmatprep.subr.bf16.mxu0 %v791
    %1074 = vmatpush1.bf16.msra.mxu0 %v790
    %1075 = vmatprep.mubr.bf16.mxu0 %v36
    %1076 = vmatmul.mubr.bf16.gmra.mrb[0].mxu0 %v35
    %v1077 = vpop.f32.mrb[0].mxu0
    %v1078 = vadd.f32 %v243, %v1077
    %v1079 = vpop.f32.mrb[0].mxu0
    %v1080 = vadd.f32 %v247, %v1079
    %v1081 = vpop.f32.mrb[0].mxu0
    %v1082 = vpop.f32.mrb[0].mxu0
    %1083 = vdwg.mxu0
    %1084 = vmatprep.subr.bf16.mxu0 %v794
    %1085 = vmatpush1.bf16.msra.mxu0 %v793
    %1086 = vmatprep.subr.bf16.mxu0 %v797
    %1087 = vmatpush1.bf16.msra.mxu0 %v796
    %1088 = vmatprep.subr.bf16.mxu0 %v800
    %1089 = vmatpush1.bf16.msra.mxu0 %v799
    %1090 = vmatprep.subr.bf16.mxu0 %v803
    %1091 = vmatpush1.bf16.msra.mxu0 %v802
    %1092 = vmatprep.subr.bf16.mxu0 %v806
    %1093 = vmatpush1.bf16.msra.mxu0 %v805
    %1094 = vmatprep.subr.bf16.mxu0 %v809
    %1095 = vmatpush1.bf16.msra.mxu0 %v808
    %1096 = vmatprep.subr.bf16.mxu0 %v812
    %1097 = vmatpush1.bf16.msra.mxu0 %v811
    %1098 = vmatprep.subr.bf16.mxu0 %v815
    %1099 = vmatpush1.bf16.msra.mxu0 %v814
    %1100 = vmatprep.subr.bf16.mxu0 %v818
    %1101 = vmatpush1.bf16.msra.mxu0 %v817
    %1102 = vmatprep.subr.bf16.mxu0 %v821
    %1103 = vmatpush1.bf16.msra.mxu0 %v820
    %1104 = vmatprep.subr.bf16.mxu0 %v824
    %1105 = vmatpush1.bf16.msra.mxu0 %v823
    %1106 = vmatprep.subr.bf16.mxu0 %v827
    %1107 = vmatpush1.bf16.msra.mxu0 %v826
    %1108 = vmatprep.subr.bf16.mxu0 %v830
    %1109 = vmatpush1.bf16.msra.mxu0 %v829
    %1110 = vmatprep.subr.bf16.mxu0 %v833
    %1111 = vmatpush1.bf16.msra.mxu0 %v832
    %1112 = vmatprep.subr.bf16.mxu0 %v836
    %1113 = vmatpush1.bf16.msra.mxu0 %v835
    %1114 = vmatprep.subr.bf16.mxu0 %v839
    %1115 = vmatpush1.bf16.msra.mxu0 %v838
    %1116 = vmatprep.mubr.bf16.mxu0 %v38
    %1117 = vmatmul.mubr.bf16.gmra.mrb[0].mxu0 %v37
    %v1118 = vpop.f32.mrb[0].mxu0
    %v1119 = vadd.f32 %v1078, %v1118
    %v1120 = vpop.f32.mrb[0].mxu0
    %v1121 = vadd.f32 %v1080, %v1120
    %v1122 = vpop.f32.mrb[0].mxu0
    %v1123 = vpop.f32.mrb[0].mxu0
    %1124 = vdwg.mxu0
    %1125 = vmatprep.subr.bf16.mxu0 %v842
    %1126 = vmatpush1.bf16.msra.mxu0 %v841
    %1127 = vmatprep.subr.bf16.mxu0 %v845
    %1128 = vmatpush1.bf16.msra.mxu0 %v844
    %1129 = vmatprep.subr.bf16.mxu0 %v848
    %1130 = vmatpush1.bf16.msra.mxu0 %v847
    %1131 = vmatprep.subr.bf16.mxu0 %v851
    %1132 = vmatpush1.bf16.msra.mxu0 %v850
    %1133 = vmatprep.subr.bf16.mxu0 %v854
    %1134 = vmatpush1.bf16.msra.mxu0 %v853
    %1135 = vmatprep.subr.bf16.mxu0 %v857
    %1136 = vmatpush1.bf16.msra.mxu0 %v856
    %1137 = vmatprep.subr.bf16.mxu0 %v860
    %1138 = vmatpush1.bf16.msra.mxu0 %v859
    %1139 = vmatprep.subr.bf16.mxu0 %v863
    %1140 = vmatpush1.bf16.msra.mxu0 %v862
    %1141 = vmatprep.subr.bf16.mxu0 %v866
    %1142 = vmatpush1.bf16.msra.mxu0 %v865
    %1143 = vmatprep.subr.bf16.mxu0 %v869
    %1144 = vmatpush1.bf16.msra.mxu0 %v868
    %1145 = vmatprep.subr.bf16.mxu0 %v872
    %1146 = vmatpush1.bf16.msra.mxu0 %v871
    %1147 = vmatprep.subr.bf16.mxu0 %v875
    %1148 = vmatpush1.bf16.msra.mxu0 %v874
    %1149 = vmatprep.subr.bf16.mxu0 %v878
    %1150 = vmatpush1.bf16.msra.mxu0 %v877
    %1151 = vmatprep.subr.bf16.mxu0 %v881
    %1152 = vmatpush1.bf16.msra.mxu0 %v880
    %1153 = vmatprep.subr.bf16.mxu0 %v884
    %1154 = vmatpush1.bf16.msra.mxu0 %v883
    %1155 = vmatprep.subr.bf16.mxu0 %v887
    %1156 = vmatpush1.bf16.msra.mxu0 %v886
    %1157 = vmatprep.mubr.bf16.mxu0 %v40
    %1158 = vmatmul.mubr.bf16.gmra.mrb[0].mxu0 %v39
    %v1159 = vpop.f32.mrb[0].mxu0
    %v1160 = vadd.f32 %v1119, %v1159
    %v1161 = vpop.f32.mrb[0].mxu0
    %v1162 = vadd.f32 %v1121, %v1161
    %v1163 = vpop.f32.mrb[0].mxu0
    %v1164 = vpop.f32.mrb[0].mxu0
    %1165 = vdwg.mxu0
    %1166 = vmatprep.subr.bf16.mxu0 %v890
    %1167 = vmatpush1.bf16.msra.mxu0 %v889
    %1168 = vmatprep.subr.bf16.mxu0 0
    %1169 = vmatpush1.bf16.msra.mxu0 0
    %1170 = vmatprep.subr.bf16.mxu0 0
    %1171 = vmatpush1.bf16.msra.mxu0 0
    %1172 = vmatprep.subr.bf16.mxu0 0
    %1173 = vmatpush1.bf16.msra.mxu0 0
    %1174 = vmatprep.subr.bf16.mxu0 0
    %1175 = vmatpush1.bf16.msra.mxu0 0
    %1176 = vmatprep.subr.bf16.mxu0 0
    %1177 = vmatpush1.bf16.msra.mxu0 0
    %1178 = vmatprep.subr.bf16.mxu0 0
    %1179 = vmatpush1.bf16.msra.mxu0 0
    %1180 = vmatprep.subr.bf16.mxu0 0
    %1181 = vmatpush1.bf16.msra.mxu0 0
    %1182 = vmatprep.subr.bf16.mxu0 0
    %1183 = vmatpush1.bf16.msra.mxu0 0
    %1184 = vmatprep.subr.bf16.mxu0 0
    %1185 = vmatpush1.bf16.msra.mxu0 0
    %1186 = vmatprep.subr.bf16.mxu0 0
    %1187 = vmatpush1.bf16.msra.mxu0 0
    %1188 = vmatprep.subr.bf16.mxu0 0
    %1189 = vmatpush1.bf16.msra.mxu0 0
    %1190 = vmatprep.subr.bf16.mxu0 0
    %1191 = vmatpush1.bf16.msra.mxu0 0
    %1192 = vmatprep.subr.bf16.mxu0 0
    %1193 = vmatpush1.bf16.msra.mxu0 0
    %1194 = vmatprep.subr.bf16.mxu0 0
    %1195 = vmatpush1.bf16.msra.mxu0 0
    %1196 = vmatprep.subr.bf16.mxu0 0
    %1197 = vmatpush1.bf16.msra.mxu0 0
    %1198 = vmatprep.mubr.bf16.mxu0 0
    %1199 = vmatmul.mubr.bf16.gmra.mrb[0].mxu0 %v1041
    %v1200 = vpop.f32.mrb[0].mxu0
    %v1201 = vadd.f32 %v1160, %v1200
    %v1202 = vpop.f32.mrb[0].mxu0
    %v1203 = vadd.f32 %v1162, %v1202
    %v1204 = vpop.f32.mrb[0].mxu0
    %v1205 = vpop.f32.mrb[0].mxu0
    %1206 = vdwg.mxu0
    %1207 = vmatprep.subr.bf16.mxu0 0
    %1208 = vmatpush1.bf16.msra.mxu0 %v747
    %1209 = vmatprep.subr.bf16.mxu0 0
    %1210 = vmatpush1.bf16.msra.mxu0 %v750
    %1211 = vmatprep.subr.bf16.mxu0 0
    %1212 = vmatpush1.bf16.msra.mxu0 %v753
    %1213 = vmatprep.subr.bf16.mxu0 0
    %1214 = vmatpush1.bf16.msra.mxu0 %v756
    %1215 = vmatprep.subr.bf16.mxu0 0
    %1216 = vmatpush1.bf16.msra.mxu0 %v759
    %1217 = vmatprep.subr.bf16.mxu0 0
    %1218 = vmatpush1.bf16.msra.mxu0 %v762
    %1219 = vmatprep.subr.bf16.mxu0 0
    %1220 = vmatpush1.bf16.msra.mxu0 %v765
    %1221 = vmatprep.subr.bf16.mxu0 0
    %1222 = vmatpush1.bf16.msra.mxu0 %v768
    %1223 = vmatprep.subr.bf16.mxu0 0
    %1224 = vmatpush1.bf16.msra.mxu0 %v771
    %1225 = vmatprep.subr.bf16.mxu0 0
    %1226 = vmatpush1.bf16.msra.mxu0 %v774
    %1227 = vmatprep.subr.bf16.mxu0 0
    %1228 = vmatpush1.bf16.msra.mxu0 %v777
    %1229 = vmatprep.subr.bf16.mxu0 0
    %1230 = vmatpush1.bf16.msra.mxu0 %v780
    %1231 = vmatprep.subr.bf16.mxu0 0
    %1232 = vmatpush1.bf16.msra.mxu0 %v783
    %1233 = vmatprep.subr.bf16.mxu0 0
    %1234 = vmatpush1.bf16.msra.mxu0 %v786
    %1235 = vmatprep.subr.bf16.mxu0 0
    %1236 = vmatpush1.bf16.msra.mxu0 %v789
    %1237 = vmatprep.subr.bf16.mxu0 0
    %1238 = vmatpush1.bf16.msra.mxu0 %v792
    %1239 = vmatprep.mubr.bf16.mxu0 %v36
    %1240 = vmatmul.mubr.bf16.gmra.mrb[0].mxu0 %v35
    %v1241 = vpop.f32.mrb[0].mxu0
    %v1242 = vadd.f32 %v251, %v1241
    %v1243 = vpop.f32.mrb[0].mxu0
    %v1244 = vpop.f32.mrb[0].mxu0
    %v1245 = vpop.f32.mrb[0].mxu0
    %1246 = vdwg.mxu0
    %1247 = vmatprep.subr.bf16.mxu0 0
    %1248 = vmatpush1.bf16.msra.mxu0 %v795
    %1249 = vmatprep.subr.bf16.mxu0 0
    %1250 = vmatpush1.bf16.msra.mxu0 %v798
    %1251 = vmatprep.subr.bf16.mxu0 0
    %1252 = vmatpush1.bf16.msra.mxu0 %v801
    %1253 = vmatprep.subr.bf16.mxu0 0
    %1254 = vmatpush1.bf16.msra.mxu0 %v804
    %1255 = vmatprep.subr.bf16.mxu0 0
    %1256 = vmatpush1.bf16.msra.mxu0 %v807
    %1257 = vmatprep.subr.bf16.mxu0 0
    %1258 = vmatpush1.bf16.msra.mxu0 %v810
    %1259 = vmatprep.subr.bf16.mxu0 0
    %1260 = vmatpush1.bf16.msra.mxu0 %v813
    %1261 = vmatprep.subr.bf16.mxu0 0
    %1262 = vmatpush1.bf16.msra.mxu0 %v816
    %1263 = vmatprep.subr.bf16.mxu0 0
    %1264 = vmatpush1.bf16.msra.mxu0 %v819
    %1265 = vmatprep.subr.bf16.mxu0 0
    %1266 = vmatpush1.bf16.msra.mxu0 %v822
    %1267 = vmatprep.subr.bf16.mxu0 0
    %1268 = vmatpush1.bf16.msra.mxu0 %v825
    %1269 = vmatprep.subr.bf16.mxu0 0
    %1270 = vmatpush1.bf16.msra.mxu0 %v828
    %1271 = vmatprep.subr.bf16.mxu0 0
    %1272 = vmatpush1.bf16.msra.mxu0 %v831
    %1273 = vmatprep.subr.bf16.mxu0 0
    %1274 = vmatpush1.bf16.msra.mxu0 %v834
    %1275 = vmatprep.subr.bf16.mxu0 0
    %1276 = vmatpush1.bf16.msra.mxu0 %v837
    %1277 = vmatprep.subr.bf16.mxu0 0
    %1278 = vmatpush1.bf16.msra.mxu0 %v840
    %1279 = vmatprep.mubr.bf16.mxu0 %v38
    %1280 = vmatmul.mubr.bf16.gmra.mrb[0].mxu0 %v37
    %v1281 = vpop.f32.mrb[0].mxu0
    %v1282 = vadd.f32 %v1242, %v1281
    %v1283 = vpop.f32.mrb[0].mxu0
    %v1284 = vpop.f32.mrb[0].mxu0
    %v1285 = vpop.f32.mrb[0].mxu0
    %1286 = vdwg.mxu0
    %1287 = vmatprep.subr.bf16.mxu0 0
    %1288 = vmatpush1.bf16.msra.mxu0 %v843
    %1289 = vmatprep.subr.bf16.mxu0 0
    %1290 = vmatpush1.bf16.msra.mxu0 %v846
    %1291 = vmatprep.subr.bf16.mxu0 0
    %1292 = vmatpush1.bf16.msra.mxu0 %v849
    %1293 = vmatprep.subr.bf16.mxu0 0
    %1294 = vmatpush1.bf16.msra.mxu0 %v852
    %1295 = vmatprep.subr.bf16.mxu0 0
    %1296 = vmatpush1.bf16.msra.mxu0 %v855
    %1297 = vmatprep.subr.bf16.mxu0 0
    %1298 = vmatpush1.bf16.msra.mxu0 %v858
    %1299 = vmatprep.subr.bf16.mxu0 0
    %1300 = vmatpush1.bf16.msra.mxu0 %v861
    %1301 = vmatprep.subr.bf16.mxu0 0
    %1302 = vmatpush1.bf16.msra.mxu0 %v864
    %1303 = vmatprep.subr.bf16.mxu0 0
    %1304 = vmatpush1.bf16.msra.mxu0 %v867
    %1305 = vmatprep.subr.bf16.mxu0 0
    %1306 = vmatpush1.bf16.msra.mxu0 %v870
    %1307 = vmatprep.subr.bf16.mxu0 0
    %1308 = vmatpush1.bf16.msra.mxu0 %v873
    %1309 = vmatprep.subr.bf16.mxu0 0
    %1310 = vmatpush1.bf16.msra.mxu0 %v876
    %1311 = vmatprep.subr.bf16.mxu0 0
    %1312 = vmatpush1.bf16.msra.mxu0 %v879
    %1313 = vmatprep.subr.bf16.mxu0 0
    %1314 = vmatpush1.bf16.msra.mxu0 %v882
    %1315 = vmatprep.subr.bf16.mxu0 0
    %1316 = vmatpush1.bf16.msra.mxu0 %v885
    %1317 = vmatprep.subr.bf16.mxu0 0
    %1318 = vmatpush1.bf16.msra.mxu0 %v888
    %1319 = vmatprep.mubr.bf16.mxu0 %v40
    %1320 = vmatmul.mubr.bf16.gmra.mrb[0].mxu0 %v39
    %v1321 = vpop.f32.mrb[0].mxu0
    %v1322 = vadd.f32 %v1282, %v1321
    %v1323 = vpop.f32.mrb[0].mxu0
    %v1324 = vpop.f32.mrb[0].mxu0
    %v1325 = vpop.f32.mrb[0].mxu0
    %1326 = vdwg.mxu0
    %1327 = vmatprep.subr.bf16.mxu0 0
    %1328 = vmatpush1.bf16.msra.mxu0 %v891
    %1329 = vmatprep.subr.bf16.mxu0 0
    %1330 = vmatpush1.bf16.msra.mxu0 0
    %1331 = vmatprep.subr.bf16.mxu0 0
    %1332 = vmatpush1.bf16.msra.mxu0 0
    %1333 = vmatprep.subr.bf16.mxu0 0
    %1334 = vmatpush1.bf16.msra.mxu0 0
    %1335 = vmatprep.subr.bf16.mxu0 0
    %1336 = vmatpush1.bf16.msra.mxu0 0
    %1337 = vmatprep.subr.bf16.mxu0 0
    %1338 = vmatpush1.bf16.msra.mxu0 0
    %1339 = vmatprep.subr.bf16.mxu0 0
    %1340 = vmatpush1.bf16.msra.mxu0 0
    %1341 = vmatprep.subr.bf16.mxu0 0
    %1342 = vmatpush1.bf16.msra.mxu0 0
    %1343 = vmatprep.subr.bf16.mxu0 0
    %1344 = vmatpush1.bf16.msra.mxu0 0
    %1345 = vmatprep.subr.bf16.mxu0 0
    %1346 = vmatpush1.bf16.msra.mxu0 0
    %1347 = vmatprep.subr.bf16.mxu0 0
    %1348 = vmatpush1.bf16.msra.mxu0 0
    %1349 = vmatprep.subr.bf16.mxu0 0
    %1350 = vmatpush1.bf16.msra.mxu0 0
    %1351 = vmatprep.subr.bf16.mxu0 0
    %1352 = vmatpush1.bf16.msra.mxu0 0
    %1353 = vmatprep.subr.bf16.mxu0 0
    %1354 = vmatpush1.bf16.msra.mxu0 0
    %1355 = vmatprep.subr.bf16.mxu0 0
    %1356 = vmatpush1.bf16.msra.mxu0 0
    %1357 = vmatprep.subr.bf16.mxu0 0
    %1358 = vmatpush1.bf16.msra.mxu0 0
    %1359 = vmatprep.mubr.bf16.mxu0 0
    %1360 = vmatmul.mubr.bf16.gmra.mrb[0].mxu0 %v1041
    %v1361 = vpop.f32.mrb[0].mxu0
    %v1362 = vadd.f32 %v1322, %v1361
    %v1363 = vpop.f32.mrb[0].mxu0
    %v1364 = vpop.f32.mrb[0].mxu0
    %v1365 = vpop.f32.mrb[0].mxu0
    %1366 = vdwg.mxu0
    %v1367 = vmax.f32 %v1201, 0.0
    %v1368 = vmax.f32 %v1203, 0.0
    %v1369 = vmax.f32 %v1362, 0.0
    %v1370 = vpack.c.bf16 %v1367, %v1367
    %v1371 = vpack.c.bf16 %v1368, %v1368
    %v1372 = vpack.c.bf16 %v1369, %v1369
    %v1373 = vld [vmem:[%s3] sm:$0xf]
    %v1374 = vld [vmem:[%s3 + $0x4] sm:$0xf]
    %v1375 = vld [vmem:[%s3 + $0x8] sm:$0xf]
    %v1376 = vld [vmem:[%s3 + $0xc] sm:$0xf]
    %v1377 = vld [vmem:[%s3 + $0x10] sm:$0xf]
    %v1378 = vld [vmem:[%s3 + $0x14] sm:$0xf]
    %v1379 = vld [vmem:[%s3 + $0x18] sm:$0xf]
    %v1380 = vld [vmem:[%s3 + $0x1c] sm:$0xf]
    %v1381 = vld [vmem:[%s3 + $0x20] sm:$0xf]
    %v1382 = vld [vmem:[%s3 + $0x24] sm:$0xf]
    %v1383 = vld [vmem:[%s3 + $0x28] sm:$0xf]
    %v1384 = vld [vmem:[%s3 + $0x2c] sm:$0xf]
    %v1385 = vld [vmem:[%s3 + $0x30] sm:$0xf]
    %v1386 = vld [vmem:[%s3 + $0x34] sm:$0xf]
    %v1387 = vld [vmem:[%s3 + $0x38] sm:$0xf]
    %v1388 = vld [vmem:[%s3 + $0x3c] sm:$0xf]
    %v1389 = vld [vmem:[%s3 + $0x40] sm:$0xf]
    %v1390 = vld [vmem:[%s3 + $0x44] sm:$0xf]
    %v1391 = vld [vmem:[%s3 + $0x48] sm:$0xf]
    %v1392 = vld [vmem:[%s3 + $0x4c] sm:$0xf]
    %v1393 = vld [vmem:[%s3 + $0x50] sm:$0xf]
    %v1394 = vld [vmem:[%s3 + $0x54] sm:$0xf]
    %v1395 = vld [vmem:[%s3 + $0x58] sm:$0xf]
    %v1396 = vld [vmem:[%s3 + $0x5c] sm:$0xf]
    %v1397 = vld [vmem:[%s3 + $0x60] sm:$0xf]
    %v1398 = vld [vmem:[%s3 + $0x64] sm:$0xf]
    %v1399 = vld [vmem:[%s3 + $0x68] sm:$0xf]
    %v1400 = vld [vmem:[%s3 + $0x6c] sm:$0xf]
    %v1401 = vld [vmem:[%s3 + $0x70] sm:$0xf]
    %v1402 = vld [vmem:[%s3 + $0x74] sm:$0xf]
    %v1403 = vld [vmem:[%s3 + $0x78] sm:$0xf]
    %v1404 = vld [vmem:[%s3 + $0x7c] sm:$0xf]
    %v1405 = vld [vmem:[%s3 + $0x80] sm:$0xf]
    %v1406 = vld [vmem:[%s3 + $0x84] sm:$0xf]
    %v1407 = vld [vmem:[%s3 + $0x88] sm:$0xf]
    %v1408 = vld [vmem:[%s3 + $0x8c] sm:$0xf]
    %v1409 = vld [vmem:[%s3 + $0x90] sm:$0xf]
    %v1410 = vld [vmem:[%s3 + $0x94] sm:$0xf]
    %v1411 = vld [vmem:[%s3 + $0x98] sm:$0xf]
    %v1412 = vld [vmem:[%s3 + $0x9c] sm:$0xf]
    %v1413 = vld [vmem:[%s4] sm:$0x1]
    %v1415 = vlaneseq
    %v1416 = vshrl.u32 %v1415, 7
    %v1417 = vsub.s32 0, %v1416
    %v1418 = vrot.slane %v1413, %v1417
    %v1460 = vunpack.c.l.b16 %v1373
    %v1461 = vunpack.c.l.b16 %v1374
    %v1462 = vunpack.c.l.b16 %v1375
    %v1463 = vunpack.c.l.b16 %v1376
    %v1464 = vunpack.c.l.b16 %v1377
    %v1465 = vunpack.c.l.b16 %v1378
    %v1466 = vunpack.c.l.b16 %v1379
    %v1467 = vunpack.c.l.b16 %v1380
    %v1468 = vunpack.c.l.b16 %v1381
    %v1469 = vunpack.c.l.b16 %v1382
    %v1470 = vunpack.c.l.b16 %v1383
    %v1471 = vunpack.c.l.b16 %v1384
    %v1472 = vunpack.c.l.b16 %v1385
    %v1473 = vunpack.c.l.b16 %v1386
    %v1474 = vunpack.c.l.b16 %v1387
    %v1475 = vunpack.c.l.b16 %v1388
    %v1476 = vunpack.c.l.b16 %v1389
    %v1477 = vunpack.c.l.b16 %v1390
    %v1478 = vunpack.c.l.b16 %v1391
    %v1479 = vunpack.c.l.b16 %v1392
    %v1480 = vunpack.c.l.b16 %v1393
    %v1481 = vunpack.c.l.b16 %v1394
    %v1482 = vunpack.c.l.b16 %v1395
    %v1483 = vunpack.c.l.b16 %v1396
    %v1484 = vunpack.c.l.b16 %v1397
    %v1485 = vunpack.c.l.b16 %v1398
    %v1486 = vunpack.c.l.b16 %v1399
    %v1487 = vunpack.c.l.b16 %v1400
    %v1488 = vunpack.c.l.b16 %v1401
    %v1489 = vunpack.c.l.b16 %v1402
    %v1490 = vunpack.c.l.b16 %v1403
    %v1491 = vunpack.c.l.b16 %v1404
    %v1492 = vunpack.c.l.b16 %v1405
    %v1493 = vunpack.c.l.b16 %v1406
    %v1494 = vunpack.c.l.b16 %v1407
    %v1495 = vunpack.c.l.b16 %v1408
    %v1496 = vunpack.c.l.b16 %v1409
    %v1497 = vunpack.c.l.b16 %v1410
    %v1498 = vunpack.c.l.b16 %v1411
    %v1499 = vunpack.c.l.b16 %v1412
    %v1500 = vpack.c.b16 %v1461, %v1460
    %v1501 = vpack.c.b16 %v1463, %v1462
    %v1502 = vpack.c.b16 %v1465, %v1464
    %v1503 = vpack.c.b16 %v1467, %v1466
    %v1504 = vpack.c.b16 %v1469, %v1468
    %v1505 = vpack.c.b16 %v1471, %v1470
    %v1506 = vpack.c.b16 %v1473, %v1472
    %v1507 = vpack.c.b16 %v1475, %v1474
    %v1508 = vpack.c.b16 %v1477, %v1476
    %v1509 = vpack.c.b16 %v1479, %v1478
    %v1510 = vpack.c.b16 %v1481, %v1480
    %v1511 = vpack.c.b16 %v1483, %v1482
    %v1512 = vpack.c.b16 %v1485, %v1484
    %v1513 = vpack.c.b16 %v1487, %v1486
    %v1514 = vpack.c.b16 %v1489, %v1488
    %v1515 = vpack.c.b16 %v1491, %v1490
    %v1516 = vpack.c.b16 %v1493, %v1492
    %v1517 = vpack.c.b16 %v1495, %v1494
    %v1518 = vpack.c.b16 %v1497, %v1496
    %v1519 = vpack.c.b16 %v1499, %v1498
    %vm1540 = vcmask 523264
    %v1542 = vsel %vm1540, %v1372, 0
    %1544 = vmatprep.subr.bf16.mxu0 0
    %1545 = vmatpush1.bf16.msra.mxu0 %v1500
    %1546 = vmatprep.subr.bf16.mxu0 0
    %1547 = vmatpush1.bf16.msra.mxu0 %v1501
    %1548 = vmatprep.subr.bf16.mxu0 0
    %1549 = vmatpush1.bf16.msra.mxu0 %v1502
    %1550 = vmatprep.subr.bf16.mxu0 0
    %1551 = vmatpush1.bf16.msra.mxu0 %v1503
    %1552 = vmatprep.subr.bf16.mxu0 0
    %1553 = vmatpush1.bf16.msra.mxu0 %v1504
    %1554 = vmatprep.subr.bf16.mxu0 0
    %1555 = vmatpush1.bf16.msra.mxu0 %v1505
    %1556 = vmatprep.subr.bf16.mxu0 0
    %1557 = vmatpush1.bf16.msra.mxu0 %v1506
    %1558 = vmatprep.subr.bf16.mxu0 0
    %1559 = vmatpush1.bf16.msra.mxu0 %v1507
    %1560 = vmatprep.subr.bf16.mxu0 0
    %1561 = vmatpush1.bf16.msra.mxu0 %v1508
    %1562 = vmatprep.subr.bf16.mxu0 0
    %1563 = vmatpush1.bf16.msra.mxu0 %v1509
    %1564 = vmatprep.subr.bf16.mxu0 0
    %1565 = vmatpush1.bf16.msra.mxu0 %v1510
    %1566 = vmatprep.subr.bf16.mxu0 0
    %1567 = vmatpush1.bf16.msra.mxu0 %v1511
    %1568 = vmatprep.subr.bf16.mxu0 0
    %1569 = vmatpush1.bf16.msra.mxu0 %v1512
    %1570 = vmatprep.subr.bf16.mxu0 0
    %1571 = vmatpush1.bf16.msra.mxu0 %v1513
    %1572 = vmatprep.subr.bf16.mxu0 0
    %1573 = vmatpush1.bf16.msra.mxu0 %v1514
    %1574 = vmatprep.subr.bf16.mxu0 0
    %1575 = vmatpush1.bf16.msra.mxu0 %v1515
    %1576 = vmatprep.mubr.bf16.mxu0 %v1371
    %1577 = vmatmul.mubr.bf16.gmra.mrb[0].mxu0 %v1370
    %v1578 = vpop.f32.mrb[0].mxu0
    %v1579 = vadd.f32 %v1418, %v1578
    %v1580 = vpop.f32.mrb[0].mxu0
    %v1581 = vpop.f32.mrb[0].mxu0
    %v1582 = vpop.f32.mrb[0].mxu0
    %1583 = vdwg.mxu0
    %1584 = vmatprep.subr.bf16.mxu0 0
    %1585 = vmatpush1.bf16.msra.mxu0 %v1516
    %1586 = vmatprep.subr.bf16.mxu0 0
    %1587 = vmatpush1.bf16.msra.mxu0 %v1517
    %1588 = vmatprep.subr.bf16.mxu0 0
    %1589 = vmatpush1.bf16.msra.mxu0 %v1518
    %1590 = vmatprep.subr.bf16.mxu0 0
    %1591 = vmatpush1.bf16.msra.mxu0 %v1519
    %1592 = vmatprep.subr.bf16.mxu0 0
    %1593 = vmatpush1.bf16.msra.mxu0 0
    %1594 = vmatprep.subr.bf16.mxu0 0
    %1595 = vmatpush1.bf16.msra.mxu0 0
    %1596 = vmatprep.subr.bf16.mxu0 0
    %1597 = vmatpush1.bf16.msra.mxu0 0
    %1598 = vmatprep.subr.bf16.mxu0 0
    %1599 = vmatpush1.bf16.msra.mxu0 0
    %1600 = vmatprep.subr.bf16.mxu0 0
    %1601 = vmatpush1.bf16.msra.mxu0 0
    %1602 = vmatprep.subr.bf16.mxu0 0
    %1603 = vmatpush1.bf16.msra.mxu0 0
    %1604 = vmatprep.subr.bf16.mxu0 0
    %1605 = vmatpush1.bf16.msra.mxu0 0
    %1606 = vmatprep.subr.bf16.mxu0 0
    %1607 = vmatpush1.bf16.msra.mxu0 0
    %1608 = vmatprep.subr.bf16.mxu0 0
    %1609 = vmatpush1.bf16.msra.mxu0 0
    %1610 = vmatprep.subr.bf16.mxu0 0
    %1611 = vmatpush1.bf16.msra.mxu0 0
    %1612 = vmatprep.subr.bf16.mxu0 0
    %1613 = vmatpush1.bf16.msra.mxu0 0
    %1614 = vmatprep.subr.bf16.mxu0 0
    %1615 = vmatpush1.bf16.msra.mxu0 0
    %1616 = vmatprep.mubr.bf16.mxu0 0
    %1617 = vmatmul.mubr.bf16.gmra.mrb[0].mxu0 %v1542
    %v1618 = vpop.f32.mrb[0].mxu0
    %v1619 = vadd.f32 %v1579, %v1618
    %v1620 = vpop.f32.mrb[0].mxu0
    %v1621 = vpop.f32.mrb[0].mxu0
    %v1622 = vpop.f32.mrb[0].mxu0
    %1623 = vdwg.mxu0
    %v1624 = vmax.f32 %v1619, 0.0
    %v1625 = vpack.c.bf16 %v1624, %v1624
    %v1626 = vld [vmem:[%s5] sm:$0xf]
    %v1627 = vld [vmem:[%s5 + $0x4] sm:$0xf]
    %v1628 = vld [vmem:[%s5 + $0x8] sm:$0xf]
    %v1629 = vld [vmem:[%s5 + $0xc] sm:$0xf]
    %v1630 = vld [vmem:[%s5 + $0x10] sm:$0xf]
    %v1631 = vld [vmem:[%s5 + $0x14] sm:$0xf]
    %v1632 = vld [vmem:[%s5 + $0x18] sm:$0xf]
    %v1633 = vld [vmem:[%s5 + $0x1c] sm:$0xf]
    %v1634 = vld [vmem:[%s5 + $0x20] sm:$0xf]
    %v1635 = vld [vmem:[%s5 + $0x24] sm:$0xf]
    %v1636 = vld [vmem:[%s5 + $0x28] sm:$0xf]
    %v1637 = vld [vmem:[%s5 + $0x2c] sm:$0xf]
    %v1638 = vld [vmem:[%s5 + $0x30] sm:$0x3]
    %v1639 = vld [vmem:[%s6] sm:$0x1]
    %v1641 = vlaneseq
    %v1642 = vshrl.u32 %v1641, 7
    %v1643 = vsub.s32 0, %v1642
    %v1644 = vrot.slane %v1639, %v1643
    %v1659 = vunpack.c.l.b16 %v1626
    %v1660 = vunpack.c.l.b16 %v1627
    %v1661 = vunpack.c.l.b16 %v1628
    %v1662 = vunpack.c.l.b16 %v1629
    %v1663 = vunpack.c.l.b16 %v1630
    %v1664 = vunpack.c.l.b16 %v1631
    %v1665 = vunpack.c.l.b16 %v1632
    %v1666 = vunpack.c.l.b16 %v1633
    %v1667 = vunpack.c.l.b16 %v1634
    %v1668 = vunpack.c.l.b16 %v1635
    %v1669 = vunpack.c.l.b16 %v1636
    %v1670 = vunpack.c.l.b16 %v1637
    %v1671 = vunpack.c.l.b16 %v1638
    %v1672 = vpack.c.b16 %v1660, %v1659
    %v1673 = vpack.c.b16 %v1662, %v1661
    %v1674 = vpack.c.b16 %v1664, %v1663
    %v1675 = vpack.c.b16 %v1666, %v1665
    %v1676 = vpack.c.b16 %v1668, %v1667
    %v1677 = vpack.c.b16 %v1670, %v1669
    %v1678 = vpack.c.b16 %v1671, %v1671
    %vm1685 = vcmask 818176
    %v1687 = vsel %vm1685, %v1625, 0
    %vm1689 = vcmask 1041408
    %v1691 = vsel %vm1689, %v1678, 0
    %1693 = vmatprep.subr.bf16.mxu0 0
    %1694 = vmatpush1.bf16.msra.mxu0 %v1672
    %1695 = vmatprep.subr.bf16.mxu0 0
    %1696 = vmatpush1.bf16.msra.mxu0 %v1673
    %1697 = vmatprep.subr.bf16.mxu0 0
    %1698 = vmatpush1.bf16.msra.mxu0 %v1674
    %1699 = vmatprep.subr.bf16.mxu0 0
    %1700 = vmatpush1.bf16.msra.mxu0 %v1675
    %1701 = vmatprep.subr.bf16.mxu0 0
    %1702 = vmatpush1.bf16.msra.mxu0 %v1676
    %1703 = vmatprep.subr.bf16.mxu0 0
    %1704 = vmatpush1.bf16.msra.mxu0 %v1677
    %1705 = vmatprep.subr.bf16.mxu0 0
    %1706 = vmatpush1.bf16.msra.mxu0 %v1691
    %1707 = vmatprep.subr.bf16.mxu0 0
    %1708 = vmatpush1.bf16.msra.mxu0 0
    %1709 = vmatprep.subr.bf16.mxu0 0
    %1710 = vmatpush1.bf16.msra.mxu0 0
    %1711 = vmatprep.subr.bf16.mxu0 0
    %1712 = vmatpush1.bf16.msra.mxu0 0
    %1713 = vmatprep.subr.bf16.mxu0 0
    %1714 = vmatpush1.bf16.msra.mxu0 0
    %1715 = vmatprep.subr.bf16.mxu0 0
    %1716 = vmatpush1.bf16.msra.mxu0 0
    %1717 = vmatprep.subr.bf16.mxu0 0
    %1718 = vmatpush1.bf16.msra.mxu0 0
    %1719 = vmatprep.subr.bf16.mxu0 0
    %1720 = vmatpush1.bf16.msra.mxu0 0
    %1721 = vmatprep.subr.bf16.mxu0 0
    %1722 = vmatpush1.bf16.msra.mxu0 0
    %1723 = vmatprep.subr.bf16.mxu0 0
    %1724 = vmatpush1.bf16.msra.mxu0 0
    %1725 = vmatprep.mubr.bf16.mxu0 0
    %1726 = vmatmul.mubr.bf16.gmra.mrb[0].mxu0 %v1687
    %v1727 = vpop.f32.mrb[0].mxu0
    %v1728 = vadd.f32 %v1644, %v1727
    %v1729 = vpop.f32.mrb[0].mxu0
    %v1730 = vpop.f32.mrb[0].mxu0
    %v1731 = vpop.f32.mrb[0].mxu0
    %1732 = vdwg.mxu0
    %vm1733 = vcmask 80896
    %v1734 = vsel %vm1733, %v1728, -inf
    %v1735 = vrot.slane %v1734, 4
    %v1736 = vmax.f32 %v1734, %v1735
    %v1737 = vrot.slane %v1736, 2
    %v1738 = vmax.f32 %v1736, %v1737
    %v1739 = vrot.slane %v1738, 1
    %v1740 = vmax.f32 %v1738, %v1739
    %v1741 = vsub.f32 %v1728, %v1740
    %v1742 = vmul.f32 %v1741, 1.442695
    %v1743 = vpow.pop %v1742
    %v1744 = vsel %vm1733, %v1743, 0.0
    %v1745 = vrot.slane %v1744, 4
    %v1746 = vadd.f32 %v1744, %v1745
    %v1747 = vrot.slane %v1746, 2
    %v1748 = vadd.f32 %v1746, %v1747
    %v1749 = vrot.slane %v1748, 1
    %v1750 = vadd.f32 %v1748, %v1749
    %v1751 = vlog2.pop %v1750
    %v1752 = vmul.f32 %v1751, 0.6931472
    %v1753 = vsub.f32 %v1741, %v1752
    %1754 = vst.msk [vmem:[#allocation2] sm:$0xff] %vm1733, %v1753
    // Predicated region
    $region30: #{basic_linear_model_forward.1} parent=1 // pred_check
      _
    $region31: #{basic_linear_model_forward.1} parent=1 // pred_check_branch
      %1756 = sbr.rel (0) target = $region33
    $region32: #{basic_linear_model_forward.1} parent=1 // pred_region
      %s1758 = ssub.s32 128, 128
      %1759 = vsyncadd [#allocation3], %s1758
      %s1761 = sshll.u32 [#allocation2], 4
      %s1762 = int_to_ptr.vmem [resolvable:$true] %s1761
      %1764 = dma.vmem_to_hbm [thread:$0]  %s1762, 128, %s7, [#allocation3]
    $region33: #{basic_linear_model_forward.1} parent=1 // pred_fallthru
      _
    // Predicated region
    $region34: #{basic_linear_model_forward.1} parent=1 // pred_check
      _
    $region35: #{basic_linear_model_forward.1} parent=1 // pred_check_branch
      %1766 = sbr.rel (0) target = $region37
    $region36: #{basic_linear_model_forward.1} parent=1 // pred_region
      %1767 = dma.done [#allocation3], 128
    $region37: #{basic_linear_model_forward.1} parent=1 // pred_fallthru
      _
    %1768 = vsyncpa [#allocation3], 1

</llo_original>
